<compile_context>
chip_gen: v6e
topology: v6e:2x2x1
jax: 0.10.0
libtpu: 0.0.40
codegen_flags: <defaults>
</compile_context>

<pallas_src>
import functools

import jax
import jax.numpy as jnp
from jax.experimental import pallas as pl
from jax.experimental.pallas import tpu as pltpu

# ----------------------------- config (small) -------------------------------
N_CLASSES = 4          # ('__background__', 'a', 'b', 'c')
POOL = 2               # cfg.POOLING_SIZE (small)
SPATIAL_SCALE = 1.0 / 16.0
IN_CHANNEL = 64        # head / instance-DA feature width (small stand-in for 4096)
DOUT_BASE = 32         # dout_base_model (small)
N_ANCHORS = 3
N_ROIS = 8             # fixed number of proposals per image
LANE = 128
INS_OFF = N_CLASSES + 4 * N_CLASSES   # lane where ins_fc1 starts / sigmoid lane
INS_DIM = 32                          # ins_fc1 width
VMEM_LIMIT = 32 * 1024 * 1024         # explicit scoped-VMEM budget on every call


def _round_up(x, m):
    return ((x + m - 1) // m) * m


# ------------------------------ Pallas kernels ------------------------------
def _linear_kernel(x_ref, w_ref, b_ref, o_ref, *, act):
    y = jnp.dot(x_ref[...], w_ref[...], preferred_element_type=jnp.float32) + b_ref[...]
    if act == "relu":
        y = jnp.maximum(y, 0.0)
    o_ref[...] = y.astype(o_ref.dtype)


def pallas_linear_tiled(x, w, b, *, act="none", tm, out_dtype=jnp.bfloat16):
    """x:(Mp,Kp) bf16, w:(Kp,Np) bf16 (pre-padded at init), b:(1,Np) f32."""
    Mp, Kp = x.shape
    _, Np = w.shape
    return pl.pallas_call(
        functools.partial(_linear_kernel, act=act),
        out_shape=jax.ShapeDtypeStruct((Mp, Np), out_dtype),
        grid=(Mp // tm,),
        in_specs=[
            pl.BlockSpec((tm, Kp), lambda i: (i, 0)),
            # TODO(synk): at real widths add pipeline_mode=pl.Buffered(1) to the
            # grid-invariant weight/bias specs and K/N-tile the reduction so the
            # single-block weights stay inside v7x's 64 MiB VMEM.
            pl.BlockSpec((Kp, Np), lambda i: (0, 0)),
            pl.BlockSpec((1, Np), lambda i: (0, 0)),
        ],
        out_specs=pl.BlockSpec((tm, Np), lambda i: (i, 0)),
        compiler_params=pltpu.CompilerParams(
            dimension_semantics=("parallel",),
            vmem_limit_bytes=VMEM_LIMIT),
    )(x, w, b)


def _netd_kernel(x_ref, wc_ref, bc_ref, wf_ref, bf_ref, feat_ref, dom_ref, *, hw):
    """One image per grid step: 1x1 conv -> relu -> global mean pool -> fc."""
    x = x_ref[0]                                                   # (HWp, Cp) bf16
    h = jnp.dot(x, wc_ref[...], preferred_element_type=jnp.float32) + bc_ref[...]
    h = jnp.maximum(h, 0.0)
    row = jax.lax.broadcasted_iota(jnp.int32, h.shape, 0)
    h = jnp.where(row < hw, h, 0.0)                                # mask padded rows
    pooled = jnp.sum(h, axis=0, keepdims=True) * (1.0 / hw)        # VPU mean pool
    pooled8 = jnp.broadcast_to(pooled, (8, LANE))
    dom = jnp.dot(pooled8.astype(jnp.bfloat16), wf_ref[...],
                  preferred_element_type=jnp.float32) + bf_ref[...]
    feat_ref[...] = pooled8.astype(feat_ref.dtype)
    dom_ref[...] = dom.astype(dom_ref.dtype)


def _rpn_kernel(x_ref, wc_ref, bc_ref, wh_ref, bh_ref, o_ref):
    h = jnp.dot(x_ref[...], wc_ref[...], preferred_element_type=jnp.float32) + bc_ref[...]
    h = jnp.maximum(h, 0.0)
    y = jnp.dot(h.astype(jnp.bfloat16), wh_ref[...],
                preferred_element_type=jnp.float32) + bh_ref[...]
    o_ref[...] = y.astype(o_ref.dtype)


def _roi_head_kernel(x_ref, w6_ref, b6_ref, w7_ref, b7_ref, wh_ref, bh_ref,
                     w2_ref, b2_ref, feat_ref, out_ref, loss_ref,
                     *, n_cls, n_rois, sig_col, label):
    # fc6 -> relu -> fc7 -> relu  (== _head_to_tail)
    h6 = jnp.dot(x_ref[...], w6_ref[...], preferred_element_type=jnp.float32) + b6_ref[...]
    h6 = jnp.maximum(h6, 0.0)
    h7 = jnp.dot(h6.astype(jnp.bfloat16), w7_ref[...],
                 preferred_element_type=jnp.float32) + b7_ref[...]
    h7 = jnp.maximum(h7, 0.0)
    feat_ref[...] = h7.astype(feat_ref.dtype)

    # lane-dense fused head: [0:n_cls]=cls_score, [n_cls:sig_col]=bbox_pred,
    # [sig_col:sig_col+INS_DIM]=ins_fc1
    heads = jnp.dot(h7.astype(jnp.bfloat16), wh_ref[...],
                    preferred_element_type=jnp.float32) + bh_ref[...]
    col = jax.lax.broadcasted_iota(jnp.int32, heads.shape, 1)
    row = jax.lax.broadcasted_iota(jnp.int32, heads.shape, 0)
    is_cls = col < n_cls

    # masked softmax over the first n_cls lanes (f32 math, EUP reciprocal)
    logits = jnp.where(is_cls, heads, -1e30)
    m = jnp.max(logits, axis=-1, keepdims=True)
    e = jnp.where(is_cls, jnp.exp(logits - m), 0.0)
    prob = e * pl.reciprocal(jnp.sum(e, axis=-1, keepdims=True), approx=True)

    # instance DA: relu(ins_fc1) @ ins_fc2 + sigmoid.  w2 is zero outside the
    # ins_fc1 rows and writes its single output into lane `sig_col`.
    ins_h = jnp.maximum(heads, 0.0)
    pre = jnp.dot(ins_h.astype(jnp.bfloat16), w2_ref[...],
                  preferred_element_type=jnp.float32) + b2_ref[...]
    sig = pl.reciprocal(1.0 + jnp.exp(-pre), approx=True)

    # single lane-dense bf16 output slab: [cls_prob | bbox_pred | sigmoid]
    fused = jnp.where(is_cls, prob, heads)
    fused = jnp.where(col == sig_col, sig, fused)
    out_ref[...] = fused.astype(out_ref.dtype)

    # BCE(mean) epilogue over the (n_rois, 1) real sigmoid entries -> SMEM scalar
    eps = 1e-7
    p = jnp.clip(sig, eps, 1.0 - eps)
    y = jnp.float32(label)
    bce = -(y * jnp.log(p) + (1.0 - y) * jnp.log(1.0 - p))
    valid = (col == sig_col) & (row < n_rois)
    loss_ref[0, 0] = jnp.sum(jnp.where(valid, bce, 0.0)) / jnp.float32(n_rois)


# ------------------------------- JAX glue -----------------------------------
def _extract_patches(x, kh, kw, stride, pad):
    """im2col on NHWC bf16 -> (B*Ho*Wo, kh*kw*C)."""
    xpad = jnp.pad(x, ((0, 0), (pad, pad), (pad, pad), (0, 0)))
    B, H, W, C = xpad.shape
    Ho = (H - kh) // stride + 1
    Wo = (W - kw) // stride + 1
    cols = []
    for i in range(kh):
        for j in range(kw):
            cols.append(xpad[:, i:i + stride * Ho:stride, j:j + stride * Wo:stride, :])
    patches = jnp.concatenate(cols, axis=-1)
    return patches.reshape(B * Ho * Wo, kh * kw * C), (B, Ho, Wo)


def conv2d(x, wp, bp, cout, *, stride, pad, tm, act="relu"):
    """3x3 conv as im2col + tiled Pallas matmul; bf16 activations throughout."""
    # TODO(synk): at real backbone sizes move the im2col taps inside the Pallas
    # kernel (shifted pl.ds reads with a 2-row halo, accumulating on the MXU)
    # to avoid materializing the 9x patch slab in HBM.
    patches, (B, Ho, Wo) = _extract_patches(x.astype(jnp.bfloat16), 3, 3, stride, pad)
    M, K = patches.shape
    Kp = wp.shape[0]
    Mp = _round_up(M, tm)
    xp = jnp.pad(patches, ((0, Mp - M), (0, Kp - K)))
    y = pallas_linear_tiled(xp, wp, bp, act=act, tm=tm)   # bf16 out
    return y[:M, :cout].reshape(B, Ho, Wo, cout)


def netd_fused(params, base_feat):
    """netD: conv -> relu -> per-image mean pool -> fc; grid over images ('parallel')."""
    B, H, W, C = base_feat.shape
    hw = H * W
    HWp = _round_up(max(hw, 16), 16)
    Cp = params["d_conv_wp"].shape[0]
    x = jnp.pad(base_feat.reshape(B, hw, C).astype(jnp.bfloat16),
                ((0, 0), (0, HWp - hw), (0, Cp - C)))
    feat, dom = pl.pallas_call(
        functools.partial(_netd_kernel, hw=hw),
        out_shape=(jax.ShapeDtypeStruct((B * 8, LANE), jnp.float32),
                   jax.ShapeDtypeStruct((B * 8, LANE), jnp.float32)),
        grid=(B,),
        in_specs=[
            pl.BlockSpec((1, HWp, Cp), lambda b: (b, 0, 0)),
            pl.BlockSpec((Cp, LANE), lambda b: (0, 0)),
            pl.BlockSpec((1, LANE), lambda b: (0, 0)),
            pl.BlockSpec((LANE, LANE), lambda b: (0, 0)),
            pl.BlockSpec((1, LANE), lambda b: (0, 0)),
        ],
        out_specs=(pl.BlockSpec((8, LANE), lambda b: (b, 0)),
                   pl.BlockSpec((8, LANE), lambda b: (b, 0))),
        compiler_params=pltpu.CompilerParams(
            dimension_semantics=("parallel",),
            vmem_limit_bytes=VMEM_LIMIT),
    )(x, params["d_conv_wp"], params["d_conv_bp"],
      params["d_fc_wp"], params["d_fc_bp"])
    domain_p = dom.reshape(B, 8, LANE)[:, 0, :2]
    d_feat = feat.reshape(B, 8, LANE)[:, 0, :DOUT_BASE]
    return domain_p, d_feat


def rpn_fused(params, base_feat):
    """RPN 3x3 conv + concatenated cls/bbox heads; parallel M-grid, bf16 output."""
    patches, _ = _extract_patches(base_feat.astype(jnp.bfloat16), 3, 3, 1, 1)
    M, K = patches.shape
    Kp = params["rpn_conv_wp"].shape[0]
    tm = 16
    Mp = _round_up(M, tm)
    xp = jnp.pad(patches, ((0, Mp - M), (0, Kp - K)))
    out = pl.pallas_call(
        _rpn_kernel,
        out_shape=jax.ShapeDtypeStruct((Mp, LANE), jnp.bfloat16),
        grid=(Mp // tm,),
        in_specs=[
            pl.BlockSpec((tm, Kp), lambda i: (i, 0)),
            pl.BlockSpec((Kp, LANE), lambda i: (0, 0)),
            pl.BlockSpec((1, LANE), lambda i: (0, 0)),
            pl.BlockSpec((LANE, LANE), lambda i: (0, 0)),
            pl.BlockSpec((1, LANE), lambda i: (0, 0)),
        ],
        out_specs=pl.BlockSpec((tm, LANE), lambda i: (i, 0)),
        compiler_params=pltpu.CompilerParams(
            dimension_semantics=("parallel",),
            vmem_limit_bytes=VMEM_LIMIT),
    )(xp, params["rpn_conv_wp"], params["rpn_conv_bp"],
      params["rpn_head_wp"], params["rpn_head_bp"])
    rpn_cls_score = out[:M, :2 * N_ANCHORS]
    rpn_bbox_pred = out[:M, 2 * N_ANCHORS:6 * N_ANCHORS]
    return rpn_cls_score, rpn_bbox_pred


def roi_head_fused(params, pooled_flat, target):
    """fc6 -> fc7 -> {cls,bbox,ins_fc1} -> softmax / ins_fc2+sigmoid / BCE, one call."""
    R, K = pooled_flat.shape
    Kp = params["fc6_wp"].shape[0]
    Rp = _round_up(max(R, 16), 16)
    xp = jnp.pad(pooled_flat.astype(jnp.bfloat16), ((0, Rp - R), (0, Kp - K)))
    kernel = functools.partial(_roi_head_kernel, n_cls=N_CLASSES, n_rois=R,
                               sig_col=INS_OFF, label=1.0 if target else 0.0)
    slab = pl.BlockSpec((Rp, LANE), lambda i: (0, 0))
    wspec = pl.BlockSpec((LANE, LANE), lambda i: (0, 0))
    bspec = pl.BlockSpec((1, LANE), lambda i: (0, 0))
    feat, fused, loss = pl.pallas_call(
        kernel,
        out_shape=(jax.ShapeDtypeStruct((Rp, LANE), jnp.bfloat16),
                   jax.ShapeDtypeStruct((Rp, LANE), jnp.bfloat16),
                   jax.ShapeDtypeStruct((1, 1), jnp.float32)),
        grid=(1,),
        in_specs=[pl.BlockSpec((Rp, Kp), lambda i: (0, 0)),
                  wspec, bspec, wspec, bspec, wspec, bspec, wspec, bspec],
        out_specs=(slab, slab,
                   pl.BlockSpec(memory_space=pltpu.MemorySpace.SMEM)),
        compiler_params=pltpu.CompilerParams(
            dimension_semantics=("arbitrary",),
            vmem_limit_bytes=VMEM_LIMIT),
    )(xp, params["fc6_wp"], params["fc6_bp"], params["fc7_wp"], params["fc7_bp"],
      params["head_wp"], params["head_bp"], params["ins2_wp"], params["ins2_bp"])
    pooled_feat = feat[:R, :IN_CHANNEL]
    cls_prob = fused[:R, :N_CLASSES]
    bbox_pred = fused[:R, N_CLASSES:INS_OFF]
    instance_sigmoid = fused[:R, INS_OFF:INS_OFF + 1]
    DA_ins_loss_cls = loss[0, 0]
    return pooled_feat, cls_prob, bbox_pred, instance_sigmoid, DA_ins_loss_cls


def roi_pool_nearest(feat, rois, pool, scale):
    """Simplified ROIAlign: nearest-neighbor sampling at bin centers (JAX gather glue)."""
    # TODO(synk): exact bilinear ROIAlign; at real ROI counts fold this gather
    # into the ROI-head pallas_call via PrefetchScalarGridSpec-driven row reads.
    b = rois[:, 0].astype(jnp.int32)
    x1, y1, x2, y2 = (rois[:, 1] * scale, rois[:, 2] * scale,
                      rois[:, 3] * scale, rois[:, 4] * scale)
    Hf, Wf = feat.shape[1], feat.shape[2]
    centers = (jnp.arange(pool, dtype=jnp.float32) + 0.5) / pool
    ys = y1[:, None] + centers[None, :] * (y2 - y1)[:, None]
    xs = x1[:, None] + centers[None, :] * (x2 - x1)[:, None]
    yi = jnp.clip(jnp.floor(ys), 0, Hf - 1).astype(jnp.int32)
    xi = jnp.clip(jnp.floor(xs), 0, Wf - 1).astype(jnp.int32)
    return feat[b[:, None, None], yi[:, :, None], xi[:, None, :], :]  # (R,pool,pool,C)


def make_rois(batch_size):
    base_boxes = jnp.array(
        [[0, 0, 31, 31], [32, 0, 63, 31], [0, 32, 31, 63], [32, 32, 63, 63],
         [8, 8, 55, 55], [16, 16, 47, 47], [0, 0, 63, 63], [24, 24, 39, 39]],
        dtype=jnp.float32)
    batch_idx = jnp.repeat(jnp.arange(batch_size, dtype=jnp.float32),
                           N_ROIS).reshape(batch_size * N_ROIS, 1)
    rois_flat = jnp.concatenate([batch_idx, jnp.tile(base_boxes, (batch_size, 1))], axis=1)
    return rois_flat.reshape(batch_size, N_ROIS, 5)


# ----------------------------- parameter init -------------------------------
def init_params(key):
    ks = jax.random.split(key, 16)

    def nrm(k, shape, std=0.01):
        return jax.random.normal(k, shape, jnp.float32) * std

    def pad_w(w, kp, np_):                    # pad once at init, store bf16 (MXU operand)
        k, n = w.shape
        return jnp.pad(w, ((0, kp - k), (0, np_ - n))).astype(jnp.bfloat16)

    def pad_b(b, np_):                        # biases stay f32
        return jnp.pad(b.reshape(1, -1).astype(jnp.float32),
                       ((0, 0), (0, np_ - b.shape[-1])))

    p = {}
    # RCNN_base1 / RCNN_base2 (3x3 convs, total stride 16)
    p["conv1_wp"] = pad_w(nrm(ks[0], (3, 3, 3, 16)).reshape(27, 16), 128, LANE)
    p["conv1_bp"] = pad_b(jnp.zeros((16,)), LANE)
    p["conv2_wp"] = pad_w(nrm(ks[1], (3, 3, 16, DOUT_BASE)).reshape(144, DOUT_BASE), 256, LANE)
    p["conv2_bp"] = pad_b(jnp.zeros((DOUT_BASE,)), LANE)
    # netD (global domain classifier stand-in: 1x1 conv -> pool -> fc(2))
    p["d_conv_wp"] = pad_w(nrm(ks[2], (DOUT_BASE, DOUT_BASE)), 128, LANE)
    p["d_conv_bp"] = pad_b(jnp.zeros((DOUT_BASE,)), LANE)
    p["d_fc_wp"] = pad_w(nrm(ks[3], (DOUT_BASE, 2)), LANE, LANE)
    p["d_fc_bp"] = pad_b(jnp.zeros((2,)), LANE)
    # RPN: conv + lane-dense concatenated {cls(6) | bbox(12)} head
    p["rpn_conv_wp"] = pad_w(nrm(ks[4], (3, 3, DOUT_BASE, DOUT_BASE)).reshape(288, DOUT_BASE),
                             384, LANE)
    p["rpn_conv_bp"] = pad_b(jnp.zeros((DOUT_BASE,)), LANE)
    rpn_head = jnp.concatenate([nrm(ks[5], (DOUT_BASE, 2 * N_ANCHORS)),
                                nrm(ks[6], (DOUT_BASE, 4 * N_ANCHORS))], axis=1)
    p["rpn_head_wp"] = pad_w(rpn_head, LANE, LANE)
    p["rpn_head_bp"] = pad_b(jnp.zeros((6 * N_ANCHORS,)), LANE)
    # _head_to_tail
    p["fc6_wp"] = pad_w(nrm(ks[7], (DOUT_BASE * POOL * POOL, IN_CHANNEL)), LANE, LANE)
    p["fc6_bp"] = pad_b(jnp.zeros((IN_CHANNEL,)), LANE)
    p["fc7_wp"] = pad_w(nrm(ks[8], (IN_CHANNEL, IN_CHANNEL)), LANE, LANE)
    p["fc7_bp"] = pad_b(jnp.zeros((IN_CHANNEL,)), LANE)
    # lane-dense fused RCNN head: [cls(4) | bbox(16) | ins_fc1(32)]
    head = jnp.concatenate([nrm(ks[9], (IN_CHANNEL, N_CLASSES)),
                            nrm(ks[10], (IN_CHANNEL, 4 * N_CLASSES), 0.001),
                            nrm(ks[11], (IN_CHANNEL, INS_DIM))], axis=1)
    p["head_wp"] = pad_w(head, LANE, LANE)
    p["head_bp"] = pad_b(jnp.zeros((INS_OFF + INS_DIM,)), LANE)
    # instance-DA second fc: maps ins_fc1 rows -> single output placed at lane INS_OFF
    ins2 = jnp.zeros((LANE, LANE), jnp.float32)
    ins2 = ins2.at[INS_OFF:INS_OFF + INS_DIM, INS_OFF:INS_OFF + 1].set(
        nrm(ks[12], (INS_DIM, 1)))
    p["ins2_wp"] = ins2.astype(jnp.bfloat16)
    p["ins2_bp"] = jnp.zeros((1, LANE), jnp.float32)
    return p


# -------------------------------- forward -----------------------------------
def faster_rcnn_forward(params, im_data, im_info, gt_boxes, num_boxes,
                        target=False, eta=1.0):
    del im_info, gt_boxes, num_boxes, eta  # inference path; proposals are fixed
    batch_size = im_data.shape[0]

    x = jnp.transpose(im_data, (0, 2, 3, 1))          # NCHW -> NHWC

    # RCNN_base1 / RCNN_base2 (total stride 16), bf16 activations
    base_feat1 = conv2d(x, params["conv1_wp"], params["conv1_bp"], 16,
                        stride=4, pad=1, tm=256)
    base_feat = conv2d(base_feat1, params["conv2_wp"], params["conv2_bp"], DOUT_BASE,
                       stride=4, pad=1, tm=16)

    # grad_reverse is identity in the forward pass; domain_p and d_feat from ONE netD call
    domain_p, d_feat = netd_fused(params, base_feat)

    # RPN head (scores unused at inference; losses are 0)
    _rpn_cls_score, _rpn_bbox_pred = rpn_fused(params, base_feat)
    rpn_loss_cls = 0
    rpn_loss_bbox = 0

    # TODO(synk): anchor generation + NMS proposal layer (data-dependent sort/suppress)
    # has no clean Pallas equivalent; fixed deterministic proposals are used instead.
    rois = make_rois(batch_size)

    # ROI align (simplified) + fused head
    pooled = roi_pool_nearest(base_feat, rois.reshape(-1, 5), POOL, SPATIAL_SCALE)
    pooled_flat = pooled.reshape(pooled.shape[0], -1)          # (R, 128) bf16

    (pooled_feat, cls_prob, bbox_pred,
     instance_sigmoid, DA_ins_loss_cls) = roi_head_fused(params, pooled_flat, target)
    # TODO(synk): weight_compute (GMM-based instance reweighting) is undefined in the
    # snippet; unit weights are used, matching plain nn.BCELoss.

    instance_pooled_feat = pooled_feat
    instance_nogrd = instance_sigmoid  # identical to instance_sigmoid at inference (dedup)
    cls_i = jnp.argmax(cls_prob, axis=-1)

    if target:
        return (domain_p, DA_ins_loss_cls,
                [instance_sigmoid, d_feat, instance_pooled_feat, instance_nogrd, cls_i])

    RCNN_loss_cls = 0
    RCNN_loss_bbox = 0
    cls_prob = cls_prob.reshape(batch_size, N_ROIS, -1)
    bbox_pred = bbox_pred.reshape(batch_size, N_ROIS, -1)
    rois_label = None

    return (rois, cls_prob, bbox_pred, rpn_loss_cls, rpn_loss_bbox,
            RCNN_loss_cls, RCNN_loss_bbox, rois_label, domain_p, DA_ins_loss_cls,
            [instance_sigmoid, d_feat, instance_pooled_feat, instance_nogrd, cls_i])


# --------------------------------- main --------------------------------------
if __name__ == "__main__":
    key = jax.random.PRNGKey(0)
    k_params, k_data = jax.random.split(key)
    params = init_params(k_params)

    # small shapes: batch=2, channels=3, spatial=64 (feature map 4x4 at stride 16)
    im_data = jax.random.normal(k_data, (2, 3, 64, 64), jnp.float32)  # NCHW like PyTorch
    im_info = jnp.array([[64.0, 64.0, 1.0], [64.0, 64.0, 1.0]], jnp.float32)
    gt_boxes = jnp.zeros((2, 5, 5), jnp.float32)
    num_boxes = jnp.zeros((2,), jnp.int32)

    fwd = jax.jit(faster_rcnn_forward, static_argnames=("target",))
    outs = fwd(params, im_data, im_info, gt_boxes, num_boxes, target=False)

    for leaf in jax.tree_util.tree_leaves(outs):
        if isinstance(leaf, jax.Array):
            jax.block_until_ready(leaf)

    print("KERNEL_OK")
</pallas_src>

<mosaic_0001>
module attributes {stable_mosaic.version = 11 : i64} {
  func.func @_linear_kernel(%arg0: i32, %arg1: memref<256x128xbf16, #tpu.memory_space<vmem>>, %arg2: memref<128x128xbf16, #tpu.memory_space<vmem>>, %arg3: memref<1x128xf32, #tpu.memory_space<vmem>>, %arg4: memref<256x128xbf16, #tpu.memory_space<vmem>>) attributes {dimension_semantics = [#tpu.dimension_semantics<parallel>], iteration_bounds = array<i64: 2>, scalar_prefetch = 0 : i64, scratch_operands = 0 : i64, tpu.core_type = #tpu.core_type<tc>, window_params = [{transform_indices = @transform_0, window_bounds = array<i64: 256, 128>}, {pipeline_mode = #tpu.pipeline_mode<synchronous>, transform_indices = @transform_1, window_bounds = array<i64: 128, 128>}, {pipeline_mode = #tpu.pipeline_mode<synchronous>, transform_indices = @transform_2, window_bounds = array<i64: 1, 128>}, {transform_indices = @transform_3, window_bounds = array<i64: 256, 128>}]} {
    %c0 = arith.constant 0 : index
    %c0_0 = arith.constant 0 : index
    %0 = vector.load %arg1[%c0, %c0_0] : memref<256x128xbf16, #tpu.memory_space<vmem>>, vector<256x128xbf16>
    %c0_1 = arith.constant 0 : index
    %c0_2 = arith.constant 0 : index
    %1 = vector.load %arg2[%c0_1, %c0_2] : memref<128x128xbf16, #tpu.memory_space<vmem>>, vector<128x128xbf16>
    %cst = arith.constant dense<0.000000e+00> : vector<256x128xf32>
    %2 = tpu.matmul %0, %1, %cst {dimension_numbers = #tpu.dot_dimension_numbers<[1], [0], [0], [1], [0, 0, 1, 1], [], []>} : vector<256x128xbf16>, vector<128x128xbf16>, vector<256x128xf32> -> vector<256x128xf32>
    %c0_3 = arith.constant 0 : index
    %c0_4 = arith.constant 0 : index
    %3 = vector.load %arg3[%c0_3, %c0_4] : memref<1x128xf32, #tpu.memory_space<vmem>>, vector<1x128xf32>
    %4 = vector.broadcast %3 : vector<1x128xf32> to vector<256x128xf32>
    %5 = arith.addf %2, %4 : vector<256x128xf32>
    %cst_5 = arith.constant 0.000000e+00 : f32
    %6 = vector.broadcast %cst_5 : f32 to vector<256x128xf32>
    %7 = arith.maximumf %5, %6 : vector<256x128xf32>
    %8 = arith.truncf %7 : vector<256x128xf32> to vector<256x128xbf16>
    %c0_6 = arith.constant 0 : index
    %c0_7 = arith.constant 0 : index
    %9 = vector.load %arg4[%c0_6, %c0_7] : memref<256x128xbf16, #tpu.memory_space<vmem>>, vector<256x128xbf16>
    tpu.vector_store %arg4[%c0_6, %c0_7], %8 {strides = array<i32>} : memref<256x128xbf16, #tpu.memory_space<vmem>>, vector<256x128xbf16>,
    return
  }
  func.func @transform_0(%arg0: i32) -> (i32, i32) {
    %c0_i32 = arith.constant 0 : i32
    %c0_i32_0 = arith.constant 0 : i32
    return %arg0, %c0_i32 : i32, i32
  }
  func.func @transform_1(%arg0: i32) -> (i32, i32) {
    %c0_i32 = arith.constant 0 : i32
    %c0_i32_0 = arith.constant 0 : i32
    %c0_i32_1 = arith.constant 0 : i32
    return %c0_i32, %c0_i32_0 : i32, i32
  }
  func.func @transform_2(%arg0: i32) -> (i32, i32) {
    %c0_i32 = arith.constant 0 : i32
    %c0_i32_0 = arith.constant 0 : i32
    %c0_i32_1 = arith.constant 0 : i32
    return %c0_i32, %c0_i32_0 : i32, i32
  }
  func.func @transform_3(%arg0: i32) -> (i32, i32) {
    %c0_i32 = arith.constant 0 : i32
    %c0_i32_0 = arith.constant 0 : i32
    return %arg0, %c0_i32 : i32, i32
  }
}

module attributes {stable_mosaic.version = 11 : i64} {
  func.func @_linear_kernel(%arg0: i32, %arg1: memref<16x256xbf16, #tpu.memory_space<vmem>>, %arg2: memref<256x128xbf16, #tpu.memory_space<vmem>>, %arg3: memref<1x128xf32, #tpu.memory_space<vmem>>, %arg4: memref<16x128xbf16, #tpu.memory_space<vmem>>) attributes {dimension_semantics = [#tpu.dimension_semantics<parallel>], iteration_bounds = array<i64: 2>, scalar_prefetch = 0 : i64, scratch_operands = 0 : i64, tpu.core_type = #tpu.core_type<tc>, window_params = [{transform_indices = @transform_0, window_bounds = array<i64: 16, 256>}, {pipeline_mode = #tpu.pipeline_mode<synchronous>, transform_indices = @transform_1, window_bounds = array<i64: 256, 128>}, {pipeline_mode = #tpu.pipeline_mode<synchronous>, transform_indices = @transform_2, window_bounds = array<i64: 1, 128>}, {transform_indices = @transform_3, window_bounds = array<i64: 16, 128>}]} {
    %c0 = arith.constant 0 : index
    %c0_0 = arith.constant 0 : index
    %0 = vector.load %arg1[%c0, %c0_0] : memref<16x256xbf16, #tpu.memory_space<vmem>>, vector<16x256xbf16>
    %c0_1 = arith.constant 0 : index
    %c0_2 = arith.constant 0 : index
    %1 = vector.load %arg2[%c0_1, %c0_2] : memref<256x128xbf16, #tpu.memory_space<vmem>>, vector<256x128xbf16>
    %cst = arith.constant dense<0.000000e+00> : vector<16x128xf32>
    %2 = tpu.matmul %0, %1, %cst {dimension_numbers = #tpu.dot_dimension_numbers<[1], [0], [0], [1], [0, 0, 1, 1], [], []>} : vector<16x256xbf16>, vector<256x128xbf16>, vector<16x128xf32> -> vector<16x128xf32>
    %c0_3 = arith.constant 0 : index
    %c0_4 = arith.constant 0 : index
    %3 = vector.load %arg3[%c0_3, %c0_4] : memref<1x128xf32, #tpu.memory_space<vmem>>, vector<1x128xf32>
    %4 = vector.broadcast %3 : vector<1x128xf32> to vector<16x128xf32>
    %5 = arith.addf %2, %4 : vector<16x128xf32>
    %cst_5 = arith.constant 0.000000e+00 : f32
    %6 = vector.broadcast %cst_5 : f32 to vector<16x128xf32>
    %7 = arith.maximumf %5, %6 : vector<16x128xf32>
    %8 = arith.truncf %7 : vector<16x128xf32> to vector<16x128xbf16>
    %c0_6 = arith.constant 0 : index
    %c0_7 = arith.constant 0 : index
    %9 = vector.load %arg4[%c0_6, %c0_7] : memref<16x128xbf16, #tpu.memory_space<vmem>>, vector<16x128xbf16>
    tpu.vector_store %arg4[%c0_6, %c0_7], %8 {strides = array<i32>} : memref<16x128xbf16, #tpu.memory_space<vmem>>, vector<16x128xbf16>,
    return
  }
  func.func @transform_0(%arg0: i32) -> (i32, i32) {
    %c0_i32 = arith.constant 0 : i32
    %c0_i32_0 = arith.constant 0 : i32
    return %arg0, %c0_i32 : i32, i32
  }
  func.func @transform_1(%arg0: i32) -> (i32, i32) {
    %c0_i32 = arith.constant 0 : i32
    %c0_i32_0 = arith.constant 0 : i32
    %c0_i32_1 = arith.constant 0 : i32
    return %c0_i32, %c0_i32_0 : i32, i32
  }
  func.func @transform_2(%arg0: i32) -> (i32, i32) {
    %c0_i32 = arith.constant 0 : i32
    %c0_i32_0 = arith.constant 0 : i32
    %c0_i32_1 = arith.constant 0 : i32
    return %c0_i32, %c0_i32_0 : i32, i32
  }
  func.func @transform_3(%arg0: i32) -> (i32, i32) {
    %c0_i32 = arith.constant 0 : i32
    %c0_i32_0 = arith.constant 0 : i32
    return %arg0, %c0_i32 : i32, i32
  }
}

module attributes {stable_mosaic.version = 11 : i64} {
  func.func @_roi_head_kernel(%arg0: i32, %arg1: memref<16x128xbf16, #tpu.memory_space<vmem>>, %arg2: memref<128x128xbf16, #tpu.memory_space<vmem>>, %arg3: memref<1x128xf32, #tpu.memory_space<vmem>>, %arg4: memref<128x128xbf16, #tpu.memory_space<vmem>>, %arg5: memref<1x128xf32, #tpu.memory_space<vmem>>, %arg6: memref<128x128xbf16, #tpu.memory_space<vmem>>, %arg7: memref<1x128xf32, #tpu.memory_space<vmem>>, %arg8: memref<128x128xbf16, #tpu.memory_space<vmem>>, %arg9: memref<1x128xf32, #tpu.memory_space<vmem>>, %arg10: memref<16x128xbf16, #tpu.memory_space<vmem>>, %arg11: memref<16x128xbf16, #tpu.memory_space<vmem>>, %arg12: memref<1x1xf32, #tpu.memory_space<smem>>) attributes {dimension_semantics = [#tpu.dimension_semantics<arbitrary>], iteration_bounds = array<i64: 1>, scalar_prefetch = 0 : i64, scratch_operands = 0 : i64, tpu.core_type = #tpu.core_type<tc>, window_params = [{pipeline_mode = #tpu.pipeline_mode<synchronous>, transform_indices = @transform_0, window_bounds = array<i64: 16, 128>}, {pipeline_mode = #tpu.pipeline_mode<synchronous>, transform_indices = @transform_1, window_bounds = array<i64: 128, 128>}, {pipeline_mode = #tpu.pipeline_mode<synchronous>, transform_indices = @transform_2, window_bounds = array<i64: 1, 128>}, {pipeline_mode = #tpu.pipeline_mode<synchronous>, transform_indices = @transform_3, window_bounds = array<i64: 128, 128>}, {pipeline_mode = #tpu.pipeline_mode<synchronous>, transform_indices = @transform_4, window_bounds = array<i64: 1, 128>}, {pipeline_mode = #tpu.pipeline_mode<synchronous>, transform_indices = @transform_5, window_bounds = array<i64: 128, 128>}, {pipeline_mode = #tpu.pipeline_mode<synchronous>, transform_indices = @transform_6, window_bounds = array<i64: 1, 128>}, {pipeline_mode = #tpu.pipeline_mode<synchronous>, transform_indices = @transform_7, window_bounds = array<i64: 128, 128>}, {pipeline_mode = #tpu.pipeline_mode<synchronous>, transform_indices = @transform_8, window_bounds = array<i64: 1, 128>}, {pipeline_mode = #tpu.pipeline_mode<synchronous>, transform_indices = @transform_9, window_bounds = array<i64: 16, 128>}, {pipeline_mode = #tpu.pipeline_mode<synchronous>, transform_indices = @transform_10, window_bounds = array<i64: 16, 128>}, {transform_indices = @transform_11, window_bounds = array<i64: 1, 1>}]} {
    %c0 = arith.constant 0 : index
    %c0_0 = arith.constant 0 : index
    %0 = vector.load %arg1[%c0, %c0_0] : memref<16x128xbf16, #tpu.memory_space<vmem>>, vector<16x128xbf16>
    %c0_1 = arith.constant 0 : index
    %c0_2 = arith.constant 0 : index
    %1 = vector.load %arg2[%c0_1, %c0_2] : memref<128x128xbf16, #tpu.memory_space<vmem>>, vector<128x128xbf16>
    %cst = arith.constant dense<0.000000e+00> : vector<16x128xf32>
    %2 = tpu.matmul %0, %1, %cst {dimension_numbers = #tpu.dot_dimension_numbers<[1], [0], [0], [1], [0, 0, 1, 1], [], []>} : vector<16x128xbf16>, vector<128x128xbf16>, vector<16x128xf32> -> vector<16x128xf32>
    %c0_3 = arith.constant 0 : index
    %c0_4 = arith.constant 0 : index
    %3 = vector.load %arg3[%c0_3, %c0_4] : memref<1x128xf32, #tpu.memory_space<vmem>>, vector<1x128xf32>
    %4 = vector.broadcast %3 : vector<1x128xf32> to vector<16x128xf32>
    %5 = arith.addf %2, %4 : vector<16x128xf32>
    %cst_5 = arith.constant 0.000000e+00 : f32
    %6 = vector.broadcast %cst_5 : f32 to vector<16x128xf32>
    %7 = arith.maximumf %5, %6 : vector<16x128xf32>
    %8 = arith.truncf %7 : vector<16x128xf32> to vector<16x128xbf16>
    %c0_6 = arith.constant 0 : index
    %c0_7 = arith.constant 0 : index
    %9 = vector.load %arg4[%c0_6, %c0_7] : memref<128x128xbf16, #tpu.memory_space<vmem>>, vector<128x128xbf16>
    %cst_8 = arith.constant dense<0.000000e+00> : vector<16x128xf32>
    %10 = tpu.matmul %8, %9, %cst_8 {dimension_numbers = #tpu.dot_dimension_numbers<[1], [0], [0], [1], [0, 0, 1, 1], [], []>} : vector<16x128xbf16>, vector<128x128xbf16>, vector<16x128xf32> -> vector<16x128xf32>
    %c0_9 = arith.constant 0 : index
    %c0_10 = arith.constant 0 : index
    %11 = vector.load %arg5[%c0_9, %c0_10] : memref<1x128xf32, #tpu.memory_space<vmem>>, vector<1x128xf32>
    %12 = vector.broadcast %11 : vector<1x128xf32> to vector<16x128xf32>
    %13 = arith.addf %10, %12 : vector<16x128xf32>
    %cst_11 = arith.constant 0.000000e+00 : f32
    %14 = vector.broadcast %cst_11 : f32 to vector<16x128xf32>
    %15 = arith.maximumf %13, %14 : vector<16x128xf32>
    %16 = arith.truncf %15 : vector<16x128xf32> to vector<16x128xbf16>
    %c0_12 = arith.constant 0 : index
    %c0_13 = arith.constant 0 : index
    %17 = vector.load %arg10[%c0_12, %c0_13] : memref<16x128xbf16, #tpu.memory_space<vmem>>, vector<16x128xbf16>
    tpu.vector_store %arg10[%c0_12, %c0_13], %16 {strides = array<i32>} : memref<16x128xbf16, #tpu.memory_space<vmem>>, vector<16x128xbf16>,
    %18 = arith.truncf %15 : vector<16x128xf32> to vector<16x128xbf16>
    %c0_14 = arith.constant 0 : index
    %c0_15 = arith.constant 0 : index
    %19 = vector.load %arg6[%c0_14, %c0_15] : memref<128x128xbf16, #tpu.memory_space<vmem>>, vector<128x128xbf16>
    %cst_16 = arith.constant dense<0.000000e+00> : vector<16x128xf32>
    %20 = tpu.matmul %18, %19, %cst_16 {dimension_numbers = #tpu.dot_dimension_numbers<[1], [0], [0], [1], [0, 0, 1, 1], [], []>} : vector<16x128xbf16>, vector<128x128xbf16>, vector<16x128xf32> -> vector<16x128xf32>
    %c0_17 = arith.constant 0 : index
    %c0_18 = arith.constant 0 : index
    %21 = vector.load %arg7[%c0_17, %c0_18] : memref<1x128xf32, #tpu.memory_space<vmem>>, vector<1x128xf32>
    %22 = vector.broadcast %21 : vector<1x128xf32> to vector<16x128xf32>
    %23 = arith.addf %20, %22 : vector<16x128xf32>
    %24 = tpu.iota {dimensions = array<i32: 1>} : vector<16x128xi32>
    %25 = tpu.iota {dimensions = array<i32: 0>} : vector<16x128xi32>
    %c4_i32 = arith.constant 4 : i32
    %26 = vector.broadcast %c4_i32 : i32 to vector<16x128xi32>
    %27 = arith.cmpi slt, %24, %26 : vector<16x128xi32>
    %cst_19 = arith.constant -1.000000e+30 : f32
    %28 = vector.broadcast %cst_19 : f32 to vector<16x128xf32>
    %29 = arith.select %27, %23, %28 : vector<16x128xi1>, vector<16x128xf32>
    %cst_20 = arith.constant dense<0xFF800000> : vector<16xf32>
    %30 = vector.multi_reduction <maximumf>, %29, %cst_20 [1] : vector<16x128xf32> to vector<16xf32>
    %31 = vector.shape_cast %30 : vector<16xf32> to vector<16x1xf32>
    %32 = vector.broadcast %31 : vector<16x1xf32> to vector<16x128xf32>
    %33 = arith.subf %29, %32 : vector<16x128xf32>
    %34 = math.exp %33 : vector<16x128xf32>
    %cst_21 = arith.constant 0.000000e+00 : f32
    %35 = vector.broadcast %cst_21 : f32 to vector<16x128xf32>
    %36 = arith.select %27, %34, %35 : vector<16x128xi1>, vector<16x128xf32>
    %cst_22 = arith.constant dense<0.000000e+00> : vector<16xf32>
    %37 = vector.multi_reduction <add>, %36, %cst_22 [1] : vector<16x128xf32> to vector<16xf32>
    %38 = vector.shape_cast %37 : vector<16xf32> to vector<16x1xf32>
    %39 = tpu.reciprocal %38 {approx = true} : vector<16x1xf32> -> vector<16x1xf32>
    %40 = vector.broadcast %39 : vector<16x1xf32> to vector<16x128xf32>
    %41 = arith.mulf %36, %40 : vector<16x128xf32>
    %cst_23 = arith.constant 0.000000e+00 : f32
    %42 = vector.broadcast %cst_23 : f32 to vector<16x128xf32>
    %43 = arith.maximumf %23, %42 : vector<16x128xf32>
    %44 = arith.truncf %43 : vector<16x128xf32> to vector<16x128xbf16>
    %c0_24 = arith.constant 0 : index
    %c0_25 = arith.constant 0 : index
    %45 = vector.load %arg8[%c0_24, %c0_25] : memref<128x128xbf16, #tpu.memory_space<vmem>>, vector<128x128xbf16>
    %cst_26 = arith.constant dense<0.000000e+00> : vector<16x128xf32>
    %46 = tpu.matmul %44, %45, %cst_26 {dimension_numbers = #tpu.dot_dimension_numbers<[1], [0], [0], [1], [0, 0, 1, 1], [], []>} : vector<16x128xbf16>, vector<128x128xbf16>, vector<16x128xf32> -> vector<16x128xf32>
    %c0_27 = arith.constant 0 : index
    %c0_28 = arith.constant 0 : index
    %47 = vector.load %arg9[%c0_27, %c0_28] : memref<1x128xf32, #tpu.memory_space<vmem>>, vector<1x128xf32>
    %48 = vector.broadcast %47 : vector<1x128xf32> to vector<16x128xf32>
    %49 = arith.addf %46, %48 : vector<16x128xf32>
    %cst_29 = arith.constant 0.000000e+00 : f32
    %50 = vector.broadcast %cst_29 : f32 to vector<16x128xf32>
    %51 = arith.subf %50, %49 : vector<16x128xf32>
    %52 = math.exp %51 : vector<16x128xf32>
    %cst_30 = arith.constant 1.000000e+00 : f32
    %53 = vector.broadcast %cst_30 : f32 to vector<16x128xf32>
    %54 = arith.addf %53, %52 : vector<16x128xf32>
    %55 = tpu.reciprocal %54 {approx = true} : vector<16x128xf32> -> vector<16x128xf32>
    %56 = arith.select %27, %41, %23 : vector<16x128xi1>, vector<16x128xf32>
    %c20_i32 = arith.constant 20 : i32
    %57 = vector.broadcast %c20_i32 : i32 to vector<16x128xi32>
    %58 = arith.cmpi eq, %24, %57 : vector<16x128xi32>
    %59 = arith.select %58, %55, %56 : vector<16x128xi1>, vector<16x128xf32>
    %60 = arith.truncf %59 : vector<16x128xf32> to vector<16x128xbf16>
    %c0_31 = arith.constant 0 : index
    %c0_32 = arith.constant 0 : index
    %61 = vector.load %arg11[%c0_31, %c0_32] : memref<16x128xbf16, #tpu.memory_space<vmem>>, vector<16x128xbf16>
    tpu.vector_store %arg11[%c0_31, %c0_32], %60 {strides = array<i32>} : memref<16x128xbf16, #tpu.memory_space<vmem>>, vector<16x128xbf16>,
    %cst_33 = arith.constant 1.000000e-07 : f32
    %cst_34 = arith.constant 0.99999988 : f32
    %62 = vector.broadcast %cst_33 : f32 to vector<16x128xf32>
    %63 = arith.maximumf %62, %55 : vector<16x128xf32>
    %64 = vector.broadcast %cst_34 : f32 to vector<16x128xf32>
    %65 = arith.minimumf %64, %63 : vector<16x128xf32>
    %66 = math.log %65 : vector<16x128xf32>
    %cst_35 = arith.constant 0.000000e+00 : f32
    %67 = vector.broadcast %cst_35 : f32 to vector<16x128xf32>
    %68 = arith.mulf %67, %66 : vector<16x128xf32>
    %cst_36 = arith.constant 1.000000e+00 : f32
    %cst_37 = arith.constant 0.000000e+00 : f32
    %69 = arith.subf %cst_36, %cst_37 : f32
    %cst_38 = arith.constant 1.000000e+00 : f32
    %70 = vector.broadcast %cst_38 : f32 to vector<16x128xf32>
    %71 = arith.subf %70, %65 : vector<16x128xf32>
    %72 = math.log %71 : vector<16x128xf32>
    %73 = vector.broadcast %69 : f32 to vector<16x128xf32>
    %74 = arith.mulf %73, %72 : vector<16x128xf32>
    %75 = arith.addf %68, %74 : vector<16x128xf32>
    %cst_39 = arith.constant 0.000000e+00 : f32
    %76 = vector.broadcast %cst_39 : f32 to vector<16x128xf32>
    %77 = arith.subf %76, %75 : vector<16x128xf32>
    %c20_i32_40 = arith.constant 20 : i32
    %78 = vector.broadcast %c20_i32_40 : i32 to vector<16x128xi32>
    %79 = arith.cmpi eq, %24, %78 : vector<16x128xi32>
    %c16_i32 = arith.constant 16 : i32
    %80 = vector.broadcast %c16_i32 : i32 to vector<16x128xi32>
    %81 = arith.cmpi slt, %25, %80 : vector<16x128xi32>
    %82 = arith.andi %79, %81 : vector<16x128xi1>
    %cst_41 = arith.constant 0.000000e+00 : f32
    %83 = vector.broadcast %cst_41 : f32 to vector<16x128xf32>
    %84 = arith.select %82, %77, %83 : vector<16x128xi1>, vector<16x128xf32>
    %85 = vector.shape_cast %84 : vector<16x128xf32> to vector<1x16x128xf32>
    %cst_42 = arith.constant dense<0.000000e+00> : vector<1xf32>
    %86 = vector.multi_reduction <add>, %85, %cst_42 [1, 2] : vector<1x16x128xf32> to vector<1xf32>
    %87 = vector.shape_cast %86 : vector<1xf32> to vector<1x1x1xf32>
    %88 = vector.extract %87[0, 0, 0] : f32 from vector<1x1x1xf32>
    %cst_43 = arith.constant 1.600000e+01 : f32
    %89 = arith.divf %88, %cst_43 : f32
    %c0_44 = arith.constant 0 : index
    %c0_45 = arith.constant 0 : index
    %90 = memref.load %arg12[%c0_44, %c0_45] : memref<1x1xf32, #tpu.memory_space<smem>>
    memref.store %89, %arg12[%c0_44, %c0_45] : memref<1x1xf32, #tpu.memory_space<smem>>
    return
  }
  func.func @transform_0(%arg0: i32) -> (i32, i32) {
    %c0_i32 = arith.constant 0 : i32
    %c0_i32_0 = arith.constant 0 : i32
    %c0_i32_1 = arith.constant 0 : i32
    return %c0_i32, %c0_i32_0 : i32, i32
  }
  func.func @transform_1(%arg0: i32) -> (i32, i32) {
    %c0_i32 = arith.constant 0 : i32
    %c0_i32_0 = arith.constant 0 : i32
    %c0_i32_1 = arith.constant 0 : i32
    return %c0_i32, %c0_i32_0 : i32, i32
  }
  func.func @transform_2(%arg0: i32) -> (i32, i32) {
    %c0_i32 = arith.constant 0 : i32
    %c0_i32_0 = arith.constant 0 : i32
    %c0_i32_1 = arith.constant 0 : i32
    return %c0_i32, %c0_i32_0 : i32, i32
  }
  func.func @transform_3(%arg0: i32) -> (i32, i32) {
    %c0_i32 = arith.constant 0 : i32
    %c0_i32_0 = arith.constant 0 : i32
    %c0_i32_1 = arith.constant 0 : i32
    return %c0_i32, %c0_i32_0 : i32, i32
  }
  func.func @transform_4(%arg0: i32) -> (i32, i32) {
    %c0_i32 = arith.constant 0 : i32
    %c0_i32_0 = arith.constant 0 : i32
    %c0_i32_1 = arith.constant 0 : i32
    return %c0_i32, %c0_i32_0 : i32, i32
  }
  func.func @transform_5(%arg0: i32) -> (i32, i32) {
    %c0_i32 = arith.constant 0 : i32
    %c0_i32_0 = arith.constant 0 : i32
    %c0_i32_1 = arith.constant 0 : i32
    return %c0_i32, %c0_i32_0 : i32, i32
  }
  func.func @transform_6(%arg0: i32) -> (i32, i32) {
    %c0_i32 = arith.constant 0 : i32
    %c0_i32_0 = arith.constant 0 : i32
    %c0_i32_1 = arith.constant 0 : i32
    return %c0_i32, %c0_i32_0 : i32, i32
  }
  func.func @transform_7(%arg0: i32) -> (i32, i32) {
    %c0_i32 = arith.constant 0 : i32
    %c0_i32_0 = arith.constant 0 : i32
    %c0_i32_1 = arith.constant 0 : i32
    return %c0_i32, %c0_i32_0 : i32, i32
  }
  func.func @transform_8(%arg0: i32) -> (i32, i32) {
    %c0_i32 = arith.constant 0 : i32
    %c0_i32_0 = arith.constant 0 : i32
    %c0_i32_1 = arith.constant 0 : i32
    return %c0_i32, %c0_i32_0 : i32, i32
  }
  func.func @transform_9(%arg0: i32) -> (i32, i32) {
    %c0_i32 = arith.constant 0 : i32
    %c0_i32_0 = arith.constant 0 : i32
    %c0_i32_1 = arith.constant 0 : i32
    return %c0_i32, %c0_i32_0 : i32, i32
  }
  func.func @transform_10(%arg0: i32) -> (i32, i32) {
    %c0_i32 = arith.constant 0 : i32
    %c0_i32_0 = arith.constant 0 : i32
    %c0_i32_1 = arith.constant 0 : i32
    return %c0_i32, %c0_i32_0 : i32, i32
  }
  func.func @transform_11(%arg0: i32) -> (i32, i32) {
    %c0_i32 = arith.constant 0 : i32
    %c0_i32_0 = arith.constant 0 : i32
    %c0_i32_1 = arith.constant 0 : i32
    return %c0_i32, %c0_i32_0 : i32, i32
  }
}

module attributes {stable_mosaic.version = 11 : i64} {
  func.func @_netd_kernel(%arg0: i32, %arg1: memref<1x16x128xbf16, #tpu.memory_space<vmem>>, %arg2: memref<128x128xbf16, #tpu.memory_space<vmem>>, %arg3: memref<1x128xf32, #tpu.memory_space<vmem>>, %arg4: memref<128x128xbf16, #tpu.memory_space<vmem>>, %arg5: memref<1x128xf32, #tpu.memory_space<vmem>>, %arg6: memref<8x128xf32, #tpu.memory_space<vmem>>, %arg7: memref<8x128xf32, #tpu.memory_space<vmem>>) attributes {dimension_semantics = [#tpu.dimension_semantics<parallel>], iteration_bounds = array<i64: 2>, scalar_prefetch = 0 : i64, scratch_operands = 0 : i64, tpu.core_type = #tpu.core_type<tc>, window_params = [{transform_indices = @transform_0, window_bounds = array<i64: 1, 16, 128>}, {pipeline_mode = #tpu.pipeline_mode<synchronous>, transform_indices = @transform_1, window_bounds = array<i64: 128, 128>}, {pipeline_mode = #tpu.pipeline_mode<synchronous>, transform_indices = @transform_2, window_bounds = array<i64: 1, 128>}, {pipeline_mode = #tpu.pipeline_mode<synchronous>, transform_indices = @transform_3, window_bounds = array<i64: 128, 128>}, {pipeline_mode = #tpu.pipeline_mode<synchronous>, transform_indices = @transform_4, window_bounds = array<i64: 1, 128>}, {transform_indices = @transform_5, window_bounds = array<i64: 8, 128>}, {transform_indices = @transform_6, window_bounds = array<i64: 8, 128>}]} {
    %c0 = arith.constant 0 : index
    %c0_0 = arith.constant 0 : index
    %c0_1 = arith.constant 0 : index
    %0 = vector.load %arg1[%c0, %c0_0, %c0_1] : memref<1x16x128xbf16, #tpu.memory_space<vmem>>, vector<1x16x128xbf16>
    %1 = vector.shape_cast %0 : vector<1x16x128xbf16> to vector<16x128xbf16>
    %c0_2 = arith.constant 0 : index
    %c0_3 = arith.constant 0 : index
    %2 = vector.load %arg2[%c0_2, %c0_3] : memref<128x128xbf16, #tpu.memory_space<vmem>>, vector<128x128xbf16>
    %cst = arith.constant dense<0.000000e+00> : vector<16x128xf32>
    %3 = tpu.matmul %1, %2, %cst {dimension_numbers = #tpu.dot_dimension_numbers<[1], [0], [0], [1], [0, 0, 1, 1], [], []>} : vector<16x128xbf16>, vector<128x128xbf16>, vector<16x128xf32> -> vector<16x128xf32>
    %c0_4 = arith.constant 0 : index
    %c0_5 = arith.constant 0 : index
    %4 = vector.load %arg3[%c0_4, %c0_5] : memref<1x128xf32, #tpu.memory_space<vmem>>, vector<1x128xf32>
    %5 = vector.broadcast %4 : vector<1x128xf32> to vector<16x128xf32>
    %6 = arith.addf %3, %5 : vector<16x128xf32>
    %cst_6 = arith.constant 0.000000e+00 : f32
    %7 = vector.broadcast %cst_6 : f32 to vector<16x128xf32>
    %8 = arith.maximumf %6, %7 : vector<16x128xf32>
    %9 = tpu.iota {dimensions = array<i32: 0>} : vector<16x128xi32>
    %c16_i32 = arith.constant 16 : i32
    %10 = vector.broadcast %c16_i32 : i32 to vector<16x128xi32>
    %11 = arith.cmpi slt, %9, %10 : vector<16x128xi32>
    %cst_7 = arith.constant 0.000000e+00 : f32
    %12 = vector.broadcast %cst_7 : f32 to vector<16x128xf32>
    %13 = arith.select %11, %8, %12 : vector<16x128xi1>, vector<16x128xf32>
    %cst_8 = arith.constant dense<0.000000e+00> : vector<128xf32>
    %14 = vector.multi_reduction <add>, %13, %cst_8 [0] : vector<16x128xf32> to vector<128xf32>
    %15 = vector.shape_cast %14 : vector<128xf32> to vector<1x128xf32>
    %cst_9 = arith.constant 6.250000e-02 : f32
    %16 = vector.broadcast %cst_9 : f32 to vector<1x128xf32>
    %17 = arith.mulf %15, %16 : vector<1x128xf32>
    %18 = vector.shape_cast %17 : vector<1x128xf32> to vector<1x128xf32>
    %19 = vector.broadcast %18 : vector<1x128xf32> to vector<8x128xf32>
    %20 = arith.truncf %19 : vector<8x128xf32> to vector<8x128xbf16>
    %c0_10 = arith.constant 0 : index
    %c0_11 = arith.constant 0 : index
    %21 = vector.load %arg4[%c0_10, %c0_11] : memref<128x128xbf16, #tpu.memory_space<vmem>>, vector<128x128xbf16>
    %cst_12 = arith.constant dense<0.000000e+00> : vector<8x128xf32>
    %22 = tpu.matmul %20, %21, %cst_12 {dimension_numbers = #tpu.dot_dimension_numbers<[1], [0], [0], [1], [0, 0, 1, 1], [], []>} : vector<8x128xbf16>, vector<128x128xbf16>, vector<8x128xf32> -> vector<8x128xf32>
    %c0_13 = arith.constant 0 : index
    %c0_14 = arith.constant 0 : index
    %23 = vector.load %arg5[%c0_13, %c0_14] : memref<1x128xf32, #tpu.memory_space<vmem>>, vector<1x128xf32>
    %24 = vector.broadcast %23 : vector<1x128xf32> to vector<8x128xf32>
    %25 = arith.addf %22, %24 : vector<8x128xf32>
    %c0_15 = arith.constant 0 : index
    %c0_16 = arith.constant 0 : index
    %26 = vector.load %arg6[%c0_15, %c0_16] : memref<8x128xf32, #tpu.memory_space<vmem>>, vector<8x128xf32>
    tpu.vector_store %arg6[%c0_15, %c0_16], %19 {strides = array<i32>} : memref<8x128xf32, #tpu.memory_space<vmem>>, vector<8x128xf32>,
    %c0_17 = arith.constant 0 : index
    %c0_18 = arith.constant 0 : index
    %27 = vector.load %arg7[%c0_17, %c0_18] : memref<8x128xf32, #tpu.memory_space<vmem>>, vector<8x128xf32>
    tpu.vector_store %arg7[%c0_17, %c0_18], %25 {strides = array<i32>} : memref<8x128xf32, #tpu.memory_space<vmem>>, vector<8x128xf32>,
    return
  }
  func.func @transform_0(%arg0: i32) -> (i32, i32, i32) {
    %c0_i32 = arith.constant 0 : i32
    %c0_i32_0 = arith.constant 0 : i32
    %c0_i32_1 = arith.constant 0 : i32
    return %arg0, %c0_i32, %c0_i32_0 : i32, i32, i32
  }
  func.func @transform_1(%arg0: i32) -> (i32, i32) {
    %c0_i32 = arith.constant 0 : i32
    %c0_i32_0 = arith.constant 0 : i32
    %c0_i32_1 = arith.constant 0 : i32
    return %c0_i32, %c0_i32_0 : i32, i32
  }
  func.func @transform_2(%arg0: i32) -> (i32, i32) {
    %c0_i32 = arith.constant 0 : i32
    %c0_i32_0 = arith.constant 0 : i32
    %c0_i32_1 = arith.constant 0 : i32
    return %c0_i32, %c0_i32_0 : i32, i32
  }
  func.func @transform_3(%arg0: i32) -> (i32, i32) {
    %c0_i32 = arith.constant 0 : i32
    %c0_i32_0 = arith.constant 0 : i32
    %c0_i32_1 = arith.constant 0 : i32
    return %c0_i32, %c0_i32_0 : i32, i32
  }
  func.func @transform_4(%arg0: i32) -> (i32, i32) {
    %c0_i32 = arith.constant 0 : i32
    %c0_i32_0 = arith.constant 0 : i32
    %c0_i32_1 = arith.constant 0 : i32
    return %c0_i32, %c0_i32_0 : i32, i32
  }
  func.func @transform_5(%arg0: i32) -> (i32, i32) {
    %c0_i32 = arith.constant 0 : i32
    %c0_i32_0 = arith.constant 0 : i32
    return %arg0, %c0_i32 : i32, i32
  }
  func.func @transform_6(%arg0: i32) -> (i32, i32) {
    %c0_i32 = arith.constant 0 : i32
    %c0_i32_0 = arith.constant 0 : i32
    return %arg0, %c0_i32 : i32, i32
  }
}

</mosaic_0001>

<llo_original>
// kernel: faster_rcnn_forward.4
$region0: #{faster_rcnn_forward.4}
  #allocation0 [shape = 'u32[]', space=smem, size = 0x4, offset = 0x4, fixed_abs, tag = 'smem constant byte address 0x4 - core index']
  #allocation1 [shape = 'u32[144,128]{1,0:T(1,128)}', space=vmem, size = 0x12000, scoped, tag = 'internal scratch']
  %s0 = inlined_call_operand.vmem [shape: bf16[512,128], index: 0, kind: input, shape index: {}]
  %s1 = inlined_call_operand.vmem [shape: bf16[128,128], index: 1, kind: input, shape index: {}]
  %s2 = inlined_call_operand.vmem [shape: f32[1,128], index: 2, kind: input, shape index: {}]
  %s3 = inlined_call_operand.vmem [shape: bf16[512,128], index: 3, kind: output, shape index: {}]
  %s4 = sld [smem:[#allocation0]]
  $region45: #{faster_rcnn_forward.4} parent=0
    _
  %s6 = ssub.s32 1, %s4
  %s7 = scalar_select 0, %s6, %s4
  loop: start=0, step=1, limit=4
  $region2: #{faster_rcnn_forward.4} parent=0 // loop_pre_header
    _
  $region3: #{faster_rcnn_forward.4} parent=0 // loop_header
    %s9 = sphi 0, %s13
    %p10 = scmp.ge.s32.totalorder %s9, 4
    %s19 = sphi 0, %s21
    %s22 = sphi 0, %s19
    %s23 = sphi 0, %s22
    %s39 = sphi 0, %s23
    %s43 = sphi 0, %s43
    %s45 = sphi 0, %s43
    %s46 = sphi 0, %s45
    %s60 = sphi 0, %s46
    %s64 = sphi 0, %s64
    %s66 = sphi 0, %s64
    %s67 = sphi 0, %s66
    %s81 = sphi 0, %s67
    %s87 = sphi 0, %s89
    %s90 = sphi 0, %s87
    %s91 = sphi 0, %s90
    %s107 = sphi 0, %s91
  $region4: #{faster_rcnn_forward.4} parent=0 // loop_header_branch
    %12 = sbr.rel (%p10) target = $region8
  $region5: #{faster_rcnn_forward.4} parent=0 // loop_body
    %s14 = ssub.s32 %s9, 1
    %s15 = ssub.s32 %s9, 2
    %s16 = sadd.s32 %s9, 1
    %s17 = ssub.s32 %s9, %s16
    %p18 = scmp.eq.s32.totalorder %s17, 0
    %s20 = sadd.s32 %s19, 1
    %s21 = scalar_select %p18, %s19, %s20
    %p24 = pneg %p18
    %p25 = scmp.eq.s32.totalorder %s9, 1
    %p26 = por %p24, %p25
    %p27 = scmp.ne.s32.totalorder %s19, %s22
    %p28 = scmp.eq.s32.totalorder %s9, 0
    %p29 = por %p27, %p28
    %p30 = scmp.ne.s32.totalorder %s19, %s22
    %p31 = scmp.eq.s32.totalorder %s14, 1
    %p32 = por %p30, %p31
    %p33 = scmp.ne.s32.totalorder %s22, %s23
    %p34 = scmp.eq.s32.totalorder %s14, 0
    %p35 = por %p33, %p34
    %p36 = scmp.ne.s32.totalorder %s22, %s23
    %p37 = scmp.eq.s32.totalorder %s15, 1
    %p38 = por %p36, %p37
    %p40 = scmp.ne.s32.totalorder %s23, %s39
    %p41 = scmp.eq.s32.totalorder %s15, 0
    %p42 = por %p40, %p41
    %s44 = sadd.s32 %s43, 1
    %p47 = scmp.eq.s32.totalorder %s9, 1
    %p48 = scmp.ne.s32.totalorder %s43, %s45
    %p49 = scmp.eq.s32.totalorder %s9, 0
    %p50 = por %p48, %p49
    %p51 = scmp.ne.s32.totalorder %s43, %s45
    %p52 = scmp.eq.s32.totalorder %s14, 1
    %p53 = por %p51, %p52
    %p54 = scmp.ne.s32.totalorder %s45, %s46
    %p55 = scmp.eq.s32.totalorder %s14, 0
    %p56 = por %p54, %p55
    %p57 = scmp.ne.s32.totalorder %s45, %s46
    %p58 = scmp.eq.s32.totalorder %s15, 1
    %p59 = por %p57, %p58
    %p61 = scmp.ne.s32.totalorder %s46, %s60
    %p62 = scmp.eq.s32.totalorder %s15, 0
    %p63 = por %p61, %p62
    %s65 = sadd.s32 %s64, 1
    %p68 = scmp.eq.s32.totalorder %s9, 1
    %p69 = scmp.ne.s32.totalorder %s64, %s66
    %p70 = scmp.eq.s32.totalorder %s9, 0
    %p71 = por %p69, %p70
    %p72 = scmp.ne.s32.totalorder %s64, %s66
    %p73 = scmp.eq.s32.totalorder %s14, 1
    %p74 = por %p72, %p73
    %p75 = scmp.ne.s32.totalorder %s66, %s67
    %p76 = scmp.eq.s32.totalorder %s14, 0
    %p77 = por %p75, %p76
    %p78 = scmp.ne.s32.totalorder %s66, %s67
    %p79 = scmp.eq.s32.totalorder %s15, 1
    %p80 = por %p78, %p79
    %p82 = scmp.ne.s32.totalorder %s67, %s81
    %p83 = scmp.eq.s32.totalorder %s15, 0
    %p84 = por %p82, %p83
    %s85 = ssub.s32 %s9, %s16
    %p86 = scmp.eq.s32.totalorder %s85, 0
    %s88 = sadd.s32 %s87, 1
    %s89 = scalar_select %p86, %s87, %s88
    %p92 = pneg %p86
    %p93 = scmp.eq.s32.totalorder %s9, 1
    %p94 = por %p92, %p93
    %p95 = scmp.ne.s32.totalorder %s87, %s90
    %p96 = scmp.eq.s32.totalorder %s9, 0
    %p97 = por %p95, %p96
    %p98 = scmp.ne.s32.totalorder %s87, %s90
    %p99 = scmp.eq.s32.totalorder %s14, 1
    %p100 = por %p98, %p99
    %p101 = scmp.ne.s32.totalorder %s90, %s91
    %p102 = scmp.eq.s32.totalorder %s14, 0
    %p103 = por %p101, %p102
    %p104 = scmp.ne.s32.totalorder %s90, %s91
    %p105 = scmp.eq.s32.totalorder %s15, 1
    %p106 = por %p104, %p105
    %p108 = scmp.ne.s32.totalorder %s91, %s107
    %p109 = scmp.eq.s32.totalorder %s15, 0
    %p110 = por %p108, %p109
    %p111 = scmp.le.s32.totalorder 1, %s9
    %p112 = scmp.lt.s32.totalorder %s9, 3
    %p113 = pnand %p111, %p112
    %p114 = pneg %p113
    // Predicated region
    $region9: #{faster_rcnn_forward.4} parent=5 // pred_check
      _
    $region10: #{faster_rcnn_forward.4} parent=5 // pred_check_branch
      %116 = sbr.rel (%p113) target = $region12
    $region11: #{faster_rcnn_forward.4} parent=5 // pred_region
      %s117 = ssub.s32 %s9, 1
      // Predicated region
      $region13: #{faster_rcnn_forward.4} parent=11 // pred_check
        %p118 = pneg %p56
      $region14: #{faster_rcnn_forward.4} parent=11 // pred_check_branch
        %120 = sbr.rel (%p118) target = $region16
      $region15: #{faster_rcnn_forward.4} parent=11 // pred_region
        _
      $region16: #{faster_rcnn_forward.4} parent=11 // pred_fallthru
        _
      // Predicated region
      $region17: #{faster_rcnn_forward.4} parent=11 // pred_check
        %p121 = pneg %p77
      $region18: #{faster_rcnn_forward.4} parent=11 // pred_check_branch
        %123 = sbr.rel (%p121) target = $region20
      $region19: #{faster_rcnn_forward.4} parent=11 // pred_region
        _
      $region20: #{faster_rcnn_forward.4} parent=11 // pred_fallthru
        _
    $region12: #{faster_rcnn_forward.4} parent=5 // pred_fallthru
      _
    %p124 = scmp.lt.s32.totalorder %s9, 2
    // Predicated region
    $region21: #{faster_rcnn_forward.4} parent=5 // pred_check
      %p125 = pneg %p124
    $region22: #{faster_rcnn_forward.4} parent=5 // pred_check_branch
      %127 = sbr.rel (%p125) target = $region24
    $region23: #{faster_rcnn_forward.4} parent=5 // pred_region
      // Predicated region
      $region25: #{faster_rcnn_forward.4} parent=23 // pred_check
        %p128 = pneg %p29
      $region26: #{faster_rcnn_forward.4} parent=23 // pred_check_branch
        %130 = sbr.rel (%p128) target = $region28
      $region27: #{faster_rcnn_forward.4} parent=23 // pred_region
        %s131 = smul.u32 32, %s9
        %p132 = scmp.lt.s32.totalorder %s131, 63
        %s133 = scalar_select %p132, %s131, 63
        %s134 = smul.addr %s133, 4
        %s135 = scalar_lea.vmem %s0, %s134
        %s136 = smul.u32 32, %s9
      $region28: #{faster_rcnn_forward.4} parent=23 // pred_fallthru
        _
    $region24: #{faster_rcnn_forward.4} parent=5 // pred_fallthru
      _
    %p137 = scmp.le.s32.totalorder 1, %s9
    %p138 = scmp.lt.s32.totalorder %s9, 3
    %p139 = pnand %p137, %p138
    %p140 = pneg %p139
    // Predicated region
    $region29: #{faster_rcnn_forward.4} parent=5 // pred_check
      _
    $region30: #{faster_rcnn_forward.4} parent=5 // pred_check_branch
      %142 = sbr.rel (%p139) target = $region32
    $region31: #{faster_rcnn_forward.4} parent=5 // pred_region
      %s143 = ssub.s32 %s9, 1
      %s144 = smul.u32 32, %s14
      %p145 = scmp.lt.s32.totalorder %s144, 63
      %s146 = scalar_select %p145, %s144, 63
      %s147 = smul.addr %s146, 4
      %s148 = scalar_lea.vmem %s0, %s147
      %p149 = pneg %p35
      %p150 = pneg %p32
      %p151 = pneg %p56
      %p152 = pneg %p53
      %p153 = pneg %p77
      %p154 = pneg %p74
      %p155 = pneg %p103
      %p156 = pneg %p100
      %s157 = smul.u32 32, %s14
      %p158 = scmp.lt.s32.totalorder %s157, 63
      %s159 = scalar_select %p158, %s157, 63
      %s160 = smul.addr %s159, 4
      %s161 = scalar_lea.vmem %s3, %s160
      %s162 = smul.u32 32, %s14
      %p163 = scmp.lt.s32.totalorder %s162, 63
      %s164 = scalar_select %p163, %s162, 63
      %s165 = smul.addr %s164, 4
      %s166 = scalar_lea.vmem %s0, %s165
      %s167 = smul.u32 32, %s14
      %s168 = smul.u32 32, %s14
      %p169 = scmp.lt.s32.totalorder %s168, 63
      %s170 = scalar_select %p169, %s168, 63
      %s171 = smul.addr %s170, 4
      %s172 = scalar_lea.vmem %s3, %s171
      %s173 = smul.u32 32, %s14
      %v175 = vld [vmem:[%s166] sm:$0xf]
      %v176 = vld [vmem:[%s166 + $0x4] sm:$0xf]
      %v177 = vld [vmem:[%s166 + $0x8] sm:$0xf]
      %v178 = vld [vmem:[%s166 + $0xc] sm:$0xf]
      %v179 = vld [vmem:[%s166 + $0x10] sm:$0xf]
      %v180 = vld [vmem:[%s166 + $0x14] sm:$0xf]
      %v181 = vld [vmem:[%s166 + $0x18] sm:$0xf]
      %v182 = vld [vmem:[%s166 + $0x1c] sm:$0xf]
      %v183 = vld [vmem:[%s166 + $0x20] sm:$0xf]
      %v184 = vld [vmem:[%s166 + $0x24] sm:$0xf]
      %v185 = vld [vmem:[%s166 + $0x28] sm:$0xf]
      %v186 = vld [vmem:[%s166 + $0x2c] sm:$0xf]
      %v187 = vld [vmem:[%s166 + $0x30] sm:$0xf]
      %v188 = vld [vmem:[%s166 + $0x34] sm:$0xf]
      %v189 = vld [vmem:[%s166 + $0x38] sm:$0xf]
      %v190 = vld [vmem:[%s166 + $0x3c] sm:$0xf]
      %v191 = vld [vmem:[%s166 + $0x40] sm:$0xf]
      %v192 = vld [vmem:[%s166 + $0x44] sm:$0xf]
      %v193 = vld [vmem:[%s166 + $0x48] sm:$0xf]
      %v194 = vld [vmem:[%s166 + $0x4c] sm:$0xf]
      %v195 = vld [vmem:[%s166 + $0x50] sm:$0xf]
      %v196 = vld [vmem:[%s166 + $0x54] sm:$0xf]
      %v197 = vld [vmem:[%s166 + $0x58] sm:$0xf]
      %v198 = vld [vmem:[%s166 + $0x5c] sm:$0xf]
      %v199 = vld [vmem:[%s166 + $0x60] sm:$0xf]
      %v200 = vld [vmem:[%s166 + $0x64] sm:$0xf]
      %v201 = vld [vmem:[%s166 + $0x68] sm:$0xf]
      %v202 = vld [vmem:[%s166 + $0x6c] sm:$0xf]
      %v203 = vld [vmem:[%s166 + $0x70] sm:$0xf]
      %v204 = vld [vmem:[%s166 + $0x74] sm:$0xf]
      %v205 = vld [vmem:[%s166 + $0x78] sm:$0xf]
      %v206 = vld [vmem:[%s166 + $0x7c] sm:$0xf]
      %v207 = vld [vmem:[%s1] sm:$0xf]
      %v208 = vld [vmem:[%s1 + $0x4] sm:$0xf]
      %v209 = vld [vmem:[%s1 + $0x8] sm:$0xf]
      %v210 = vld [vmem:[%s1 + $0xc] sm:$0xf]
      %v211 = vld [vmem:[%s1 + $0x10] sm:$0xf]
      %v212 = vld [vmem:[%s1 + $0x14] sm:$0xf]
      %v213 = vld [vmem:[%s1 + $0x18] sm:$0xf]
      %v214 = vld [vmem:[%s1 + $0x1c] sm:$0xf]
      %v215 = vld [vmem:[%s1 + $0x20] sm:$0xf]
      %v216 = vld [vmem:[%s1 + $0x24] sm:$0xf]
      %v217 = vld [vmem:[%s1 + $0x28] sm:$0xf]
      %v218 = vld [vmem:[%s1 + $0x2c] sm:$0xf]
      %v219 = vld [vmem:[%s1 + $0x30] sm:$0xf]
      %v220 = vld [vmem:[%s1 + $0x34] sm:$0xf]
      %v221 = vld [vmem:[%s1 + $0x38] sm:$0xf]
      %v222 = vld [vmem:[%s1 + $0x3c] sm:$0xf]
      %v223 = vld [vmem:[%s2] sm:$0x1]
      %v225 = vlaneseq
      %v226 = vshrl.u32 %v225, 7
      %v227 = vsub.s32 0, %v226
      %v228 = vrot.slane %v223, %v227
      %v262 = vunpack.c.l.b16 %v175
      %v263 = vunpack.c.l.b16 %v176
      %v264 = vunpack.c.l.b16 %v177
      %v265 = vunpack.c.l.b16 %v178
      %v266 = vunpack.c.l.b16 %v179
      %v267 = vunpack.c.l.b16 %v180
      %v268 = vunpack.c.l.b16 %v181
      %v269 = vunpack.c.l.b16 %v182
      %v270 = vunpack.c.l.b16 %v183
      %v271 = vunpack.c.l.b16 %v184
      %v272 = vunpack.c.l.b16 %v185
      %v273 = vunpack.c.l.b16 %v186
      %v274 = vunpack.c.l.b16 %v187
      %v275 = vunpack.c.l.b16 %v188
      %v276 = vunpack.c.l.b16 %v189
      %v277 = vunpack.c.l.b16 %v190
      %v278 = vunpack.c.l.b16 %v191
      %v279 = vunpack.c.l.b16 %v192
      %v280 = vunpack.c.l.b16 %v193
      %v281 = vunpack.c.l.b16 %v194
      %v282 = vunpack.c.l.b16 %v195
      %v283 = vunpack.c.l.b16 %v196
      %v284 = vunpack.c.l.b16 %v197
      %v285 = vunpack.c.l.b16 %v198
      %v286 = vunpack.c.l.b16 %v199
      %v287 = vunpack.c.l.b16 %v200
      %v288 = vunpack.c.l.b16 %v201
      %v289 = vunpack.c.l.b16 %v202
      %v290 = vunpack.c.l.b16 %v203
      %v291 = vunpack.c.l.b16 %v204
      %v292 = vunpack.c.l.b16 %v205
      %v293 = vunpack.c.l.b16 %v206
      %v294 = vpack.c.b16 %v263, %v262
      %v295 = vpack.c.b16 %v265, %v264
      %v296 = vpack.c.b16 %v267, %v266
      %v297 = vpack.c.b16 %v269, %v268
      %v298 = vpack.c.b16 %v271, %v270
      %v299 = vpack.c.b16 %v273, %v272
      %v300 = vpack.c.b16 %v275, %v274
      %v301 = vpack.c.b16 %v277, %v276
      %v302 = vpack.c.b16 %v279, %v278
      %v303 = vpack.c.b16 %v281, %v280
      %v304 = vpack.c.b16 %v283, %v282
      %v305 = vpack.c.b16 %v285, %v284
      %v306 = vpack.c.b16 %v287, %v286
      %v307 = vpack.c.b16 %v289, %v288
      %v308 = vpack.c.b16 %v291, %v290
      %v309 = vpack.c.b16 %v293, %v292
      %v342 = vunpack.c.l.b16 %v207
      %v343 = vunpack.c.l.b16 %v208
      %v344 = vunpack.c.l.b16 %v209
      %v345 = vunpack.c.l.b16 %v210
      %v346 = vunpack.c.l.b16 %v211
      %v347 = vunpack.c.l.b16 %v212
      %v348 = vunpack.c.l.b16 %v213
      %v349 = vunpack.c.l.b16 %v214
      %v350 = vunpack.c.l.b16 %v215
      %v351 = vunpack.c.l.b16 %v216
      %v352 = vunpack.c.l.b16 %v217
      %v353 = vunpack.c.l.b16 %v218
      %v354 = vunpack.c.l.b16 %v219
      %v355 = vunpack.c.l.b16 %v220
      %v356 = vunpack.c.l.b16 %v221
      %v357 = vunpack.c.l.b16 %v222
      %v358 = vpack.c.b16 %v343, %v342
      %v359 = vpack.c.b16 %v345, %v344
      %v360 = vpack.c.b16 %v347, %v346
      %v361 = vpack.c.b16 %v349, %v348
      %v362 = vpack.c.b16 %v351, %v350
      %v363 = vpack.c.b16 %v353, %v352
      %v364 = vpack.c.b16 %v355, %v354
      %v365 = vpack.c.b16 %v357, %v356
      %374 = vmatprep.subr.bf16.mxu0 0
      %375 = vmatpush1.bf16.msra.mxu0 %v365
      %376 = vmatprep.subr.bf16.mxu0 0
      %377 = vmatpush1.bf16.msra.mxu0 %v364
      %378 = vmatprep.subr.bf16.mxu0 0
      %379 = vmatpush1.bf16.msra.mxu0 %v363
      %380 = vmatprep.subr.bf16.mxu0 0
      %381 = vmatpush1.bf16.msra.mxu0 %v362
      %382 = vmatprep.subr.bf16.mxu0 0
      %383 = vmatpush1.bf16.msra.mxu0 %v361
      %384 = vmatprep.subr.bf16.mxu0 0
      %385 = vmatpush1.bf16.msra.mxu0 %v360
      %386 = vmatprep.subr.bf16.mxu0 0
      %387 = vmatpush1.bf16.msra.mxu0 %v359
      %388 = vmatprep.subr.bf16.mxu0 0
      %389 = vmatpush1.bf16.msra.mxu0 %v358
      %390 = vmatprep.subr.bf16.mxu0 0
      %391 = vmatpush2.bf16.msra.mxu0 0
      %392 = vmatprep.subr.bf16.mxu0 0
      %393 = vmatpush2.bf16.msra.mxu0 0
      %394 = vmatprep.subr.bf16.mxu0 0
      %395 = vmatpush2.bf16.msra.mxu0 0
      %396 = vmatprep.subr.bf16.mxu0 0
      %397 = vmatpush2.bf16.msra.mxu0 0
      %398 = vmatprep.subr.bf16.mxu0 0
      %399 = vmatpush2.bf16.msra.mxu0 0
      %400 = vmatprep.subr.bf16.mxu0 0
      %401 = vmatpush2.bf16.msra.mxu0 0
      %402 = vmatprep.subr.bf16.mxu0 0
      %403 = vmatpush2.bf16.msra.mxu0 0
      %404 = vmatprep.subr.bf16.mxu0 0
      %405 = vmatpush2.bf16.msra.mxu0 0
      %406 = vmatprep.mubr.bf16.mxu0 0
      %407 = vmatmul.mubr.bf16.gmra.mxu0 %v294
      %v408 = vpop.f32.mrf.mxu0
      %v409 = vadd.f32 %v228, %v408
      %v410 = vpop.f32.mrf.mxu0
      %v411 = vpop.f32.mrf.mxu0
      %v412 = vadd.f32 %v228, %v411
      %v413 = vpop.f32.mrf.mxu0
      %414 = vmatprep.mubr.bf16.mxu0 0
      %415 = vmatmul.mubr.bf16.gmra.mxu0 %v295
      %v416 = vpop.f32.mrf.mxu0
      %v417 = vadd.f32 %v228, %v416
      %v418 = vpop.f32.mrf.mxu0
      %v419 = vpop.f32.mrf.mxu0
      %v420 = vadd.f32 %v228, %v419
      %v421 = vpop.f32.mrf.mxu0
      %422 = vmatprep.mubr.bf16.mxu0 0
      %423 = vmatmul.mubr.bf16.gmra.mxu0 %v296
      %v424 = vpop.f32.mrf.mxu0
      %v425 = vadd.f32 %v228, %v424
      %v426 = vpop.f32.mrf.mxu0
      %v427 = vpop.f32.mrf.mxu0
      %v428 = vadd.f32 %v228, %v427
      %v429 = vpop.f32.mrf.mxu0
      %430 = vmatprep.mubr.bf16.mxu0 0
      %431 = vmatmul.mubr.bf16.gmra.mxu0 %v297
      %v432 = vpop.f32.mrf.mxu0
      %v433 = vadd.f32 %v228, %v432
      %v434 = vpop.f32.mrf.mxu0
      %v435 = vpop.f32.mrf.mxu0
      %v436 = vadd.f32 %v228, %v435
      %v437 = vpop.f32.mrf.mxu0
      %438 = vmatprep.mubr.bf16.mxu0 0
      %439 = vmatmul.mubr.bf16.gmra.mxu0 %v298
      %v440 = vpop.f32.mrf.mxu0
      %v441 = vadd.f32 %v228, %v440
      %v442 = vpop.f32.mrf.mxu0
      %v443 = vpop.f32.mrf.mxu0
      %v444 = vadd.f32 %v228, %v443
      %v445 = vpop.f32.mrf.mxu0
      %446 = vmatprep.mubr.bf16.mxu0 0
      %447 = vmatmul.mubr.bf16.gmra.mxu0 %v299
      %v448 = vpop.f32.mrf.mxu0
      %v449 = vadd.f32 %v228, %v448
      %v450 = vpop.f32.mrf.mxu0
      %v451 = vpop.f32.mrf.mxu0
      %v452 = vadd.f32 %v228, %v451
      %v453 = vpop.f32.mrf.mxu0
      %454 = vmatprep.mubr.bf16.mxu0 0
      %455 = vmatmul.mubr.bf16.gmra.mxu0 %v300
      %v456 = vpop.f32.mrf.mxu0
      %v457 = vadd.f32 %v228, %v456
      %v458 = vpop.f32.mrf.mxu0
      %v459 = vpop.f32.mrf.mxu0
      %v460 = vadd.f32 %v228, %v459
      %v461 = vpop.f32.mrf.mxu0
      %462 = vmatprep.mubr.bf16.mxu0 0
      %463 = vmatmul.mubr.bf16.gmra.mxu0 %v301
      %v464 = vpop.f32.mrf.mxu0
      %v465 = vadd.f32 %v228, %v464
      %v466 = vpop.f32.mrf.mxu0
      %v467 = vpop.f32.mrf.mxu0
      %v468 = vadd.f32 %v228, %v467
      %v469 = vpop.f32.mrf.mxu0
      %470 = vmatprep.mubr.bf16.mxu0 0
      %471 = vmatmul.mubr.bf16.gmra.mxu0 %v302
      %v472 = vpop.f32.mrf.mxu0
      %v473 = vadd.f32 %v228, %v472
      %v474 = vpop.f32.mrf.mxu0
      %v475 = vpop.f32.mrf.mxu0
      %v476 = vadd.f32 %v228, %v475
      %v477 = vpop.f32.mrf.mxu0
      %478 = vmatprep.mubr.bf16.mxu0 0
      %479 = vmatmul.mubr.bf16.gmra.mxu0 %v303
      %v480 = vpop.f32.mrf.mxu0
      %v481 = vadd.f32 %v228, %v480
      %v482 = vpop.f32.mrf.mxu0
      %v483 = vpop.f32.mrf.mxu0
      %v484 = vadd.f32 %v228, %v483
      %v485 = vpop.f32.mrf.mxu0
      %486 = vmatprep.mubr.bf16.mxu0 0
      %487 = vmatmul.mubr.bf16.gmra.mxu0 %v304
      %v488 = vpop.f32.mrf.mxu0
      %v489 = vadd.f32 %v228, %v488
      %v490 = vpop.f32.mrf.mxu0
      %v491 = vpop.f32.mrf.mxu0
      %v492 = vadd.f32 %v228, %v491
      %v493 = vpop.f32.mrf.mxu0
      %494 = vmatprep.mubr.bf16.mxu0 0
      %495 = vmatmul.mubr.bf16.gmra.mxu0 %v305
      %v496 = vpop.f32.mrf.mxu0
      %v497 = vadd.f32 %v228, %v496
      %v498 = vpop.f32.mrf.mxu0
      %v499 = vpop.f32.mrf.mxu0
      %v500 = vadd.f32 %v228, %v499
      %v501 = vpop.f32.mrf.mxu0
      %502 = vmatprep.mubr.bf16.mxu0 0
      %503 = vmatmul.mubr.bf16.gmra.mxu0 %v306
      %v504 = vpop.f32.mrf.mxu0
      %v505 = vadd.f32 %v228, %v504
      %v506 = vpop.f32.mrf.mxu0
      %v507 = vpop.f32.mrf.mxu0
      %v508 = vadd.f32 %v228, %v507
      %v509 = vpop.f32.mrf.mxu0
      %510 = vmatprep.mubr.bf16.mxu0 0
      %511 = vmatmul.mubr.bf16.gmra.mxu0 %v307
      %v512 = vpop.f32.mrf.mxu0
      %v513 = vadd.f32 %v228, %v512
      %v514 = vpop.f32.mrf.mxu0
      %v515 = vpop.f32.mrf.mxu0
      %v516 = vadd.f32 %v228, %v515
      %v517 = vpop.f32.mrf.mxu0
      %518 = vmatprep.mubr.bf16.mxu0 0
      %519 = vmatmul.mubr.bf16.gmra.mxu0 %v308
      %v520 = vpop.f32.mrf.mxu0
      %v521 = vadd.f32 %v228, %v520
      %v522 = vpop.f32.mrf.mxu0
      %v523 = vpop.f32.mrf.mxu0
      %v524 = vadd.f32 %v228, %v523
      %v525 = vpop.f32.mrf.mxu0
      %526 = vmatprep.mubr.bf16.mxu0 0
      %527 = vmatmul.mubr.bf16.gmra.mxu0 %v309
      %v528 = vpop.f32.mrf.mxu0
      %v529 = vadd.f32 %v228, %v528
      %v530 = vpop.f32.mrf.mxu0
      %v531 = vpop.f32.mrf.mxu0
      %v532 = vadd.f32 %v228, %v531
      %v533 = vpop.f32.mrf.mxu0
      %534 = vdwg.mxu0
      %v535 = vmax.f32 %v409, 0.0
      %v536 = vmax.f32 %v412, 0.0
      %v537 = vmax.f32 %v417, 0.0
      %v538 = vmax.f32 %v420, 0.0
      %v539 = vmax.f32 %v425, 0.0
      %v540 = vmax.f32 %v428, 0.0
      %v541 = vmax.f32 %v433, 0.0
      %v542 = vmax.f32 %v436, 0.0
      %v543 = vmax.f32 %v441, 0.0
      %v544 = vmax.f32 %v444, 0.0
      %v545 = vmax.f32 %v449, 0.0
      %v546 = vmax.f32 %v452, 0.0
      %v547 = vmax.f32 %v457, 0.0
      %v548 = vmax.f32 %v460, 0.0
      %v549 = vmax.f32 %v465, 0.0
      %v550 = vmax.f32 %v468, 0.0
      %v551 = vmax.f32 %v473, 0.0
      %v552 = vmax.f32 %v476, 0.0
      %v553 = vmax.f32 %v481, 0.0
      %v554 = vmax.f32 %v484, 0.0
      %v555 = vmax.f32 %v489, 0.0
      %v556 = vmax.f32 %v492, 0.0
      %v557 = vmax.f32 %v497, 0.0
      %v558 = vmax.f32 %v500, 0.0
      %v559 = vmax.f32 %v505, 0.0
      %v560 = vmax.f32 %v508, 0.0
      %v561 = vmax.f32 %v513, 0.0
      %v562 = vmax.f32 %v516, 0.0
      %v563 = vmax.f32 %v521, 0.0
      %v564 = vmax.f32 %v524, 0.0
      %v565 = vmax.f32 %v529, 0.0
      %v566 = vmax.f32 %v532, 0.0
      %v567 = vpack.c.bf16 %v536, %v535
      %v568 = vpack.c.bf16 %v538, %v537
      %v569 = vpack.c.bf16 %v540, %v539
      %v570 = vpack.c.bf16 %v542, %v541
      %v571 = vpack.c.bf16 %v544, %v543
      %v572 = vpack.c.bf16 %v546, %v545
      %v573 = vpack.c.bf16 %v548, %v547
      %v574 = vpack.c.bf16 %v550, %v549
      %v575 = vpack.c.bf16 %v552, %v551
      %v576 = vpack.c.bf16 %v554, %v553
      %v577 = vpack.c.bf16 %v556, %v555
      %v578 = vpack.c.bf16 %v558, %v557
      %v579 = vpack.c.bf16 %v560, %v559
      %v580 = vpack.c.bf16 %v562, %v561
      %v581 = vpack.c.bf16 %v564, %v563
      %v582 = vpack.c.bf16 %v566, %v565
      %v599 = vunpack.c.l.b16 %v567
      %v600 = vunpack.c.h.b16 %v567
      %v601 = vunpack.c.l.b16 %v568
      %v602 = vunpack.c.h.b16 %v568
      %v603 = vunpack.c.l.b16 %v569
      %v604 = vunpack.c.h.b16 %v569
      %v605 = vunpack.c.l.b16 %v570
      %v606 = vunpack.c.h.b16 %v570
      %v607 = vunpack.c.l.b16 %v571
      %v608 = vunpack.c.h.b16 %v571
      %v609 = vunpack.c.l.b16 %v572
      %v610 = vunpack.c.h.b16 %v572
      %v611 = vunpack.c.l.b16 %v573
      %v612 = vunpack.c.h.b16 %v573
      %v613 = vunpack.c.l.b16 %v574
      %v614 = vunpack.c.h.b16 %v574
      %v615 = vunpack.c.l.b16 %v575
      %v616 = vunpack.c.h.b16 %v575
      %v617 = vunpack.c.l.b16 %v576
      %v618 = vunpack.c.h.b16 %v576
      %v619 = vunpack.c.l.b16 %v577
      %v620 = vunpack.c.h.b16 %v577
      %v621 = vunpack.c.l.b16 %v578
      %v622 = vunpack.c.h.b16 %v578
      %v623 = vunpack.c.l.b16 %v579
      %v624 = vunpack.c.h.b16 %v579
      %v625 = vunpack.c.l.b16 %v580
      %v626 = vunpack.c.h.b16 %v580
      %v627 = vunpack.c.l.b16 %v581
      %v628 = vunpack.c.h.b16 %v581
      %v629 = vunpack.c.l.b16 %v582
      %v630 = vunpack.c.h.b16 %v582
      %v631 = vpack.c.b16 %v599, %v599
      %v632 = vpack.c.b16 %v600, %v600
      %v633 = vpack.c.b16 %v601, %v601
      %v634 = vpack.c.b16 %v602, %v602
      %v635 = vpack.c.b16 %v603, %v603
      %v636 = vpack.c.b16 %v604, %v604
      %v637 = vpack.c.b16 %v605, %v605
      %v638 = vpack.c.b16 %v606, %v606
      %v639 = vpack.c.b16 %v607, %v607
      %v640 = vpack.c.b16 %v608, %v608
      %v641 = vpack.c.b16 %v609, %v609
      %v642 = vpack.c.b16 %v610, %v610
      %v643 = vpack.c.b16 %v611, %v611
      %v644 = vpack.c.b16 %v612, %v612
      %v645 = vpack.c.b16 %v613, %v613
      %v646 = vpack.c.b16 %v614, %v614
      %v647 = vpack.c.b16 %v615, %v615
      %v648 = vpack.c.b16 %v616, %v616
      %v649 = vpack.c.b16 %v617, %v617
      %v650 = vpack.c.b16 %v618, %v618
      %v651 = vpack.c.b16 %v619, %v619
      %v652 = vpack.c.b16 %v620, %v620
      %v653 = vpack.c.b16 %v621, %v621
      %v654 = vpack.c.b16 %v622, %v622
      %v655 = vpack.c.b16 %v623, %v623
      %v656 = vpack.c.b16 %v624, %v624
      %v657 = vpack.c.b16 %v625, %v625
      %v658 = vpack.c.b16 %v626, %v626
      %v659 = vpack.c.b16 %v627, %v627
      %v660 = vpack.c.b16 %v628, %v628
      %v661 = vpack.c.b16 %v629, %v629
      %v662 = vpack.c.b16 %v630, %v630
      %695 = vst [vmem:[%s172] sm:$0xf] %v631
      %696 = vst [vmem:[%s172 + $0x4] sm:$0xf] %v632
      %697 = vst [vmem:[%s172 + $0x8] sm:$0xf] %v633
      %698 = vst [vmem:[%s172 + $0xc] sm:$0xf] %v634
      %699 = vst [vmem:[%s172 + $0x10] sm:$0xf] %v635
      %700 = vst [vmem:[%s172 + $0x14] sm:$0xf] %v636
      %701 = vst [vmem:[%s172 + $0x18] sm:$0xf] %v637
      %702 = vst [vmem:[%s172 + $0x1c] sm:$0xf] %v638
      %703 = vst [vmem:[%s172 + $0x20] sm:$0xf] %v639
      %704 = vst [vmem:[%s172 + $0x24] sm:$0xf] %v640
      %705 = vst [vmem:[%s172 + $0x28] sm:$0xf] %v641
      %706 = vst [vmem:[%s172 + $0x2c] sm:$0xf] %v642
      %707 = vst [vmem:[%s172 + $0x30] sm:$0xf] %v643
      %708 = vst [vmem:[%s172 + $0x34] sm:$0xf] %v644
      %709 = vst [vmem:[%s172 + $0x38] sm:$0xf] %v645
      %710 = vst [vmem:[%s172 + $0x3c] sm:$0xf] %v646
      %711 = vst [vmem:[%s172 + $0x40] sm:$0xf] %v647
      %712 = vst [vmem:[%s172 + $0x44] sm:$0xf] %v648
      %713 = vst [vmem:[%s172 + $0x48] sm:$0xf] %v649
      %714 = vst [vmem:[%s172 + $0x4c] sm:$0xf] %v650
      %715 = vst [vmem:[%s172 + $0x50] sm:$0xf] %v651
      %716 = vst [vmem:[%s172 + $0x54] sm:$0xf] %v652
      %717 = vst [vmem:[%s172 + $0x58] sm:$0xf] %v653
      %718 = vst [vmem:[%s172 + $0x5c] sm:$0xf] %v654
      %719 = vst [vmem:[%s172 + $0x60] sm:$0xf] %v655
      %720 = vst [vmem:[%s172 + $0x64] sm:$0xf] %v656
      %721 = vst [vmem:[%s172 + $0x68] sm:$0xf] %v657
      %722 = vst [vmem:[%s172 + $0x6c] sm:$0xf] %v658
      %723 = vst [vmem:[%s172 + $0x70] sm:$0xf] %v659
      %724 = vst [vmem:[%s172 + $0x74] sm:$0xf] %v660
      %725 = vst [vmem:[%s172 + $0x78] sm:$0xf] %v661
      %726 = vst [vmem:[%s172 + $0x7c] sm:$0xf] %v662
      %s727 = smul.u32 32, %s14
      %p728 = scmp.lt.s32.totalorder %s727, 63
      %s729 = scalar_select %p728, %s727, 63
      %s730 = smul.addr %s729, 4
      %s731 = scalar_lea.vmem %s3, %s730
      // Predicated region
      $region33: #{faster_rcnn_forward.4} parent=31 // pred_check
        %p732 = pneg %p100
      $region34: #{faster_rcnn_forward.4} parent=31 // pred_check_branch
        %734 = sbr.rel (%p732) target = $region36
      $region35: #{faster_rcnn_forward.4} parent=31 // pred_region
        %s735 = smul.u32 32, %s14
      $region36: #{faster_rcnn_forward.4} parent=31 // pred_fallthru
        _
    $region32: #{faster_rcnn_forward.4} parent=5 // pred_fallthru
      _
    %p736 = scmp.le.s32.totalorder 2, %s9
    // Predicated region
    $region37: #{faster_rcnn_forward.4} parent=5 // pred_check
      %p737 = pneg %p736
    $region38: #{faster_rcnn_forward.4} parent=5 // pred_check_branch
      %739 = sbr.rel (%p737) target = $region40
    $region39: #{faster_rcnn_forward.4} parent=5 // pred_region
      %s740 = ssub.s32 %s9, 2
      // Predicated region
      $region41: #{faster_rcnn_forward.4} parent=39 // pred_check
        %p741 = pneg %p106
      $region42: #{faster_rcnn_forward.4} parent=39 // pred_check_branch
        %743 = sbr.rel (%p741) target = $region44
      $region43: #{faster_rcnn_forward.4} parent=39 // pred_region
        %s744 = smul.u32 32, %s15
        %p745 = scmp.lt.s32.totalorder %s744, 63
        %s746 = scalar_select %p745, %s744, 63
        %s747 = smul.addr %s746, 4
        %s748 = scalar_lea.vmem %s3, %s747
      $region44: #{faster_rcnn_forward.4} parent=39 // pred_fallthru
        _
    $region40: #{faster_rcnn_forward.4} parent=5 // pred_fallthru
      _
  $region6: #{faster_rcnn_forward.4} parent=0 // loop_footer
    %s13 = sadd.s32 1, %s9
  $region7: #{faster_rcnn_forward.4} parent=0 // loop_footer_branch
    %8 = sbr.rel target = $region3
  $region8: #{faster_rcnn_forward.4} parent=0 // loop_exit
    _

// kernel: tile.7
$region0: #{tile.7}
  %s0 = inlined_call_operand.vmem [shape: f32[2,8,4], index: 0, kind: input, shape index: {}]
  %s1 = inlined_call_operand.vmem [shape: f32[16,4], index: 1, kind: output, shape index: {}]
  $region1: #{tile.7} parent=0
    #allocation0 [shape = 'u8[4096]{0}', space=vmem, size = 0x1000, scoped, tag = 'scoped mem for output reshape']
    #allocation1 [shape = 'u8[16384]{0}', space=vmem, size = 0x4000, scoped, tag = 'scoped mem for input reshape']
    %s3 = sshll.u32 1, 2
    %s4 = ssub.s32 %s3, 1
    %s5 = smul.addr 2, 3
    %s6 = scalar_lea.vmem %s0, %s5
    %v7 = vld [vmem:[%s6] sm:%s4]
    %s8 = scalar_lea.vmem [#allocation1], 24
    %9 = vst [vmem:[%s8] sm:%s4] %v7
    %s10 = smul.addr 2, 2
    %s11 = scalar_lea.vmem %s0, %s10
    %v12 = vld [vmem:[%s11] sm:%s4]
    %s13 = scalar_lea.vmem [#allocation1], 16
    %14 = vst [vmem:[%s13] sm:%s4] %v12
    %s15 = scalar_lea.vmem %s0, 2
    %v16 = vld [vmem:[%s15] sm:%s4]
    %s17 = scalar_lea.vmem [#allocation1], 8
    %18 = vst [vmem:[%s17] sm:%s4] %v16
    %v19 = vld [vmem:[%s0] sm:%s4]
    %20 = vst [vmem:[#allocation1] sm:%s4] %v19
    %v21 = vld [vmem:[#allocation1] ss:$8 sm:$0xf]
    %vm22 = vcmask 64512
    %23 = vst.msk [vmem:[#allocation0] sm:$0xf] %vm22, %v21
    %s24 = scalar_lea.vmem [#allocation1], 1
    %v25 = vld [vmem:[%s24] ss:$8 sm:$0xf]
    %26 = vrot.lane.b32.xlu0 %v25, 8
    %v27 = vpop.permute.xlu0 %26
    %vm28 = vcmask 130112
    %29 = vst.msk [vmem:[#allocation0] sm:$0xf] %vm28, %v27
    %s31 = sshll.u32 1, 4
    %s32 = ssub.s32 %s31, 1
    %v34 = vld [vmem:[#allocation0] sm:%s32]
    %s35 = sshll.u32 1, 4
    %s36 = ssub.s32 %s35, 1
    %37 = vst [vmem:[%s1] sm:%s36] %v34

// kernel: faster_rcnn_forward.5
$region0: #{faster_rcnn_forward.5}
  #allocation0 [shape = 'u32[]', space=smem, size = 0x4, offset = 0x4, fixed_abs, tag = 'smem constant byte address 0x4 - core index']
  #allocation1 [shape = 'u32[144,128]{1,0:T(1,128)}', space=vmem, size = 0x12000, scoped, tag = 'internal scratch']
  %s0 = inlined_call_operand.vmem [shape: bf16[32,256], index: 0, kind: input, shape index: {}]
  %s1 = inlined_call_operand.vmem [shape: bf16[256,128], index: 1, kind: input, shape index: {}]
  %s2 = inlined_call_operand.vmem [shape: f32[1,128], index: 2, kind: input, shape index: {}]
  %s3 = inlined_call_operand.vmem [shape: bf16[32,128], index: 3, kind: output, shape index: {}]
  %s4 = sld [smem:[#allocation0]]
  $region45: #{faster_rcnn_forward.5} parent=0
    _
  %s6 = ssub.s32 1, %s4
  %s7 = scalar_select 0, %s6, %s4
  loop: start=0, step=1, limit=4
  $region2: #{faster_rcnn_forward.5} parent=0 // loop_pre_header
    _
  $region3: #{faster_rcnn_forward.5} parent=0 // loop_header
    %s9 = sphi 0, %s13
    %p10 = scmp.ge.s32.totalorder %s9, 4
    %s19 = sphi 0, %s21
    %s22 = sphi 0, %s19
    %s23 = sphi 0, %s22
    %s39 = sphi 0, %s23
    %s43 = sphi 0, %s43
    %s45 = sphi 0, %s43
    %s46 = sphi 0, %s45
    %s60 = sphi 0, %s46
    %s64 = sphi 0, %s64
    %s66 = sphi 0, %s64
    %s67 = sphi 0, %s66
    %s81 = sphi 0, %s67
    %s87 = sphi 0, %s89
    %s90 = sphi 0, %s87
    %s91 = sphi 0, %s90
    %s107 = sphi 0, %s91
  $region4: #{faster_rcnn_forward.5} parent=0 // loop_header_branch
    %12 = sbr.rel (%p10) target = $region8
  $region5: #{faster_rcnn_forward.5} parent=0 // loop_body
    %s14 = ssub.s32 %s9, 1
    %s15 = ssub.s32 %s9, 2
    %s16 = sadd.s32 %s9, 1
    %s17 = ssub.s32 %s9, %s16
    %p18 = scmp.eq.s32.totalorder %s17, 0
    %s20 = sadd.s32 %s19, 1
    %s21 = scalar_select %p18, %s19, %s20
    %p24 = pneg %p18
    %p25 = scmp.eq.s32.totalorder %s9, 1
    %p26 = por %p24, %p25
    %p27 = scmp.ne.s32.totalorder %s19, %s22
    %p28 = scmp.eq.s32.totalorder %s9, 0
    %p29 = por %p27, %p28
    %p30 = scmp.ne.s32.totalorder %s19, %s22
    %p31 = scmp.eq.s32.totalorder %s14, 1
    %p32 = por %p30, %p31
    %p33 = scmp.ne.s32.totalorder %s22, %s23
    %p34 = scmp.eq.s32.totalorder %s14, 0
    %p35 = por %p33, %p34
    %p36 = scmp.ne.s32.totalorder %s22, %s23
    %p37 = scmp.eq.s32.totalorder %s15, 1
    %p38 = por %p36, %p37
    %p40 = scmp.ne.s32.totalorder %s23, %s39
    %p41 = scmp.eq.s32.totalorder %s15, 0
    %p42 = por %p40, %p41
    %s44 = sadd.s32 %s43, 1
    %p47 = scmp.eq.s32.totalorder %s9, 1
    %p48 = scmp.ne.s32.totalorder %s43, %s45
    %p49 = scmp.eq.s32.totalorder %s9, 0
    %p50 = por %p48, %p49
    %p51 = scmp.ne.s32.totalorder %s43, %s45
    %p52 = scmp.eq.s32.totalorder %s14, 1
    %p53 = por %p51, %p52
    %p54 = scmp.ne.s32.totalorder %s45, %s46
    %p55 = scmp.eq.s32.totalorder %s14, 0
    %p56 = por %p54, %p55
    %p57 = scmp.ne.s32.totalorder %s45, %s46
    %p58 = scmp.eq.s32.totalorder %s15, 1
    %p59 = por %p57, %p58
    %p61 = scmp.ne.s32.totalorder %s46, %s60
    %p62 = scmp.eq.s32.totalorder %s15, 0
    %p63 = por %p61, %p62
    %s65 = sadd.s32 %s64, 1
    %p68 = scmp.eq.s32.totalorder %s9, 1
    %p69 = scmp.ne.s32.totalorder %s64, %s66
    %p70 = scmp.eq.s32.totalorder %s9, 0
    %p71 = por %p69, %p70
    %p72 = scmp.ne.s32.totalorder %s64, %s66
    %p73 = scmp.eq.s32.totalorder %s14, 1
    %p74 = por %p72, %p73
    %p75 = scmp.ne.s32.totalorder %s66, %s67
    %p76 = scmp.eq.s32.totalorder %s14, 0
    %p77 = por %p75, %p76
    %p78 = scmp.ne.s32.totalorder %s66, %s67
    %p79 = scmp.eq.s32.totalorder %s15, 1
    %p80 = por %p78, %p79
    %p82 = scmp.ne.s32.totalorder %s67, %s81
    %p83 = scmp.eq.s32.totalorder %s15, 0
    %p84 = por %p82, %p83
    %s85 = ssub.s32 %s9, %s16
    %p86 = scmp.eq.s32.totalorder %s85, 0
    %s88 = sadd.s32 %s87, 1
    %s89 = scalar_select %p86, %s87, %s88
    %p92 = pneg %p86
    %p93 = scmp.eq.s32.totalorder %s9, 1
    %p94 = por %p92, %p93
    %p95 = scmp.ne.s32.totalorder %s87, %s90
    %p96 = scmp.eq.s32.totalorder %s9, 0
    %p97 = por %p95, %p96
    %p98 = scmp.ne.s32.totalorder %s87, %s90
    %p99 = scmp.eq.s32.totalorder %s14, 1
    %p100 = por %p98, %p99
    %p101 = scmp.ne.s32.totalorder %s90, %s91
    %p102 = scmp.eq.s32.totalorder %s14, 0
    %p103 = por %p101, %p102
    %p104 = scmp.ne.s32.totalorder %s90, %s91
    %p105 = scmp.eq.s32.totalorder %s15, 1
    %p106 = por %p104, %p105
    %p108 = scmp.ne.s32.totalorder %s91, %s107
    %p109 = scmp.eq.s32.totalorder %s15, 0
    %p110 = por %p108, %p109
    %p111 = scmp.le.s32.totalorder 1, %s9
    %p112 = scmp.lt.s32.totalorder %s9, 3
    %p113 = pnand %p111, %p112
    %p114 = pneg %p113
    // Predicated region
    $region9: #{faster_rcnn_forward.5} parent=5 // pred_check
      _
    $region10: #{faster_rcnn_forward.5} parent=5 // pred_check_branch
      %116 = sbr.rel (%p113) target = $region12
    $region11: #{faster_rcnn_forward.5} parent=5 // pred_region
      %s117 = ssub.s32 %s9, 1
      // Predicated region
      $region13: #{faster_rcnn_forward.5} parent=11 // pred_check
        %p118 = pneg %p56
      $region14: #{faster_rcnn_forward.5} parent=11 // pred_check_branch
        %120 = sbr.rel (%p118) target = $region16
      $region15: #{faster_rcnn_forward.5} parent=11 // pred_region
        _
      $region16: #{faster_rcnn_forward.5} parent=11 // pred_fallthru
        _
      // Predicated region
      $region17: #{faster_rcnn_forward.5} parent=11 // pred_check
        %p121 = pneg %p77
      $region18: #{faster_rcnn_forward.5} parent=11 // pred_check_branch
        %123 = sbr.rel (%p121) target = $region20
      $region19: #{faster_rcnn_forward.5} parent=11 // pred_region
        _
      $region20: #{faster_rcnn_forward.5} parent=11 // pred_fallthru
        _
    $region12: #{faster_rcnn_forward.5} parent=5 // pred_fallthru
      _
    %p124 = scmp.lt.s32.totalorder %s9, 2
    // Predicated region
    $region21: #{faster_rcnn_forward.5} parent=5 // pred_check
      %p125 = pneg %p124
    $region22: #{faster_rcnn_forward.5} parent=5 // pred_check_branch
      %127 = sbr.rel (%p125) target = $region24
    $region23: #{faster_rcnn_forward.5} parent=5 // pred_region
      // Predicated region
      $region25: #{faster_rcnn_forward.5} parent=23 // pred_check
        %p128 = pneg %p29
      $region26: #{faster_rcnn_forward.5} parent=23 // pred_check_branch
        %130 = sbr.rel (%p128) target = $region28
      $region27: #{faster_rcnn_forward.5} parent=23 // pred_region
        %s131 = smul.u32 2, %s9
        %p132 = scmp.lt.s32.totalorder %s131, 3
        %s133 = scalar_select %p132, %s131, 3
        %s134 = smul.addr %s133, 2
        %s135 = smul.addr %s134, 4
        %s136 = scalar_lea.vmem %s0, %s135
        %s137 = smul.u32 2, %s9
      $region28: #{faster_rcnn_forward.5} parent=23 // pred_fallthru
        _
    $region24: #{faster_rcnn_forward.5} parent=5 // pred_fallthru
      _
    %p138 = scmp.le.s32.totalorder 1, %s9
    %p139 = scmp.lt.s32.totalorder %s9, 3
    %p140 = pnand %p138, %p139
    %p141 = pneg %p140
    // Predicated region
    $region29: #{faster_rcnn_forward.5} parent=5 // pred_check
      _
    $region30: #{faster_rcnn_forward.5} parent=5 // pred_check_branch
      %143 = sbr.rel (%p140) target = $region32
    $region31: #{faster_rcnn_forward.5} parent=5 // pred_region
      %s144 = ssub.s32 %s9, 1
      %s145 = smul.u32 2, %s14
      %p146 = scmp.lt.s32.totalorder %s145, 3
      %s147 = scalar_select %p146, %s145, 3
      %s148 = smul.addr %s147, 2
      %s149 = smul.addr %s148, 4
      %s150 = scalar_lea.vmem %s0, %s149
      %p151 = pneg %p35
      %p152 = pneg %p32
      %p153 = pneg %p56
      %p154 = pneg %p53
      %p155 = pneg %p77
      %p156 = pneg %p74
      %p157 = pneg %p103
      %p158 = pneg %p100
      %s159 = smul.u32 2, %s14
      %p160 = scmp.lt.s32.totalorder %s159, 3
      %s161 = scalar_select %p160, %s159, 3
      %s162 = smul.addr %s161, 4
      %s163 = scalar_lea.vmem %s3, %s162
      %s164 = smul.u32 2, %s14
      %p165 = scmp.lt.s32.totalorder %s164, 3
      %s166 = scalar_select %p165, %s164, 3
      %s167 = smul.addr %s166, 2
      %s168 = smul.addr %s167, 4
      %s169 = scalar_lea.vmem %s0, %s168
      %s170 = smul.u32 2, %s14
      %s171 = smul.u32 2, %s14
      %p172 = scmp.lt.s32.totalorder %s171, 3
      %s173 = scalar_select %p172, %s171, 3
      %s174 = smul.addr %s173, 4
      %s175 = scalar_lea.vmem %s3, %s174
      %s176 = smul.u32 2, %s14
      %v178 = vld [vmem:[%s169] sm:$0xff]
      %v179 = vld [vmem:[%s169 + $0x8] sm:$0xff]
      %v180 = vld [vmem:[%s1] sm:$0xf]
      %v181 = vld [vmem:[%s1 + $0x4] sm:$0xf]
      %v182 = vld [vmem:[%s1 + $0x8] sm:$0xf]
      %v183 = vld [vmem:[%s1 + $0xc] sm:$0xf]
      %v184 = vld [vmem:[%s1 + $0x10] sm:$0xf]
      %v185 = vld [vmem:[%s1 + $0x14] sm:$0xf]
      %v186 = vld [vmem:[%s1 + $0x18] sm:$0xf]
      %v187 = vld [vmem:[%s1 + $0x1c] sm:$0xf]
      %v188 = vld [vmem:[%s1 + $0x20] sm:$0xf]
      %v189 = vld [vmem:[%s1 + $0x24] sm:$0xf]
      %v190 = vld [vmem:[%s1 + $0x28] sm:$0xf]
      %v191 = vld [vmem:[%s1 + $0x2c] sm:$0xf]
      %v192 = vld [vmem:[%s1 + $0x30] sm:$0xf]
      %v193 = vld [vmem:[%s1 + $0x34] sm:$0xf]
      %v194 = vld [vmem:[%s1 + $0x38] sm:$0xf]
      %v195 = vld [vmem:[%s1 + $0x3c] sm:$0xf]
      %v196 = vld [vmem:[%s1 + $0x40] sm:$0xf]
      %v197 = vld [vmem:[%s1 + $0x44] sm:$0xf]
      %v198 = vld [vmem:[%s1 + $0x48] sm:$0xf]
      %v199 = vld [vmem:[%s1 + $0x4c] sm:$0xf]
      %v200 = vld [vmem:[%s1 + $0x50] sm:$0xf]
      %v201 = vld [vmem:[%s1 + $0x54] sm:$0xf]
      %v202 = vld [vmem:[%s1 + $0x58] sm:$0xf]
      %v203 = vld [vmem:[%s1 + $0x5c] sm:$0xf]
      %v204 = vld [vmem:[%s1 + $0x60] sm:$0xf]
      %v205 = vld [vmem:[%s1 + $0x64] sm:$0xf]
      %v206 = vld [vmem:[%s1 + $0x68] sm:$0xf]
      %v207 = vld [vmem:[%s1 + $0x6c] sm:$0xf]
      %v208 = vld [vmem:[%s1 + $0x70] sm:$0xf]
      %v209 = vld [vmem:[%s1 + $0x74] sm:$0xf]
      %v210 = vld [vmem:[%s1 + $0x78] sm:$0xf]
      %v211 = vld [vmem:[%s1 + $0x7c] sm:$0xf]
      %v212 = vld [vmem:[%s2] sm:$0x1]
      %v214 = vlaneseq
      %v215 = vshrl.u32 %v214, 7
      %v216 = vsub.s32 0, %v215
      %v217 = vrot.slane %v212, %v216
      %v221 = vunpack.c.l.b16 %v178
      %v222 = vunpack.c.h.b16 %v178
      %v223 = vunpack.c.l.b16 %v179
      %v224 = vunpack.c.h.b16 %v179
      %v225 = vpack.c.b16 %v223, %v221
      %v226 = vpack.c.b16 %v224, %v222
      %v261 = vunpack.c.l.b16 %v180
      %v262 = vunpack.c.l.b16 %v181
      %v263 = vunpack.c.l.b16 %v182
      %v264 = vunpack.c.l.b16 %v183
      %v265 = vunpack.c.l.b16 %v184
      %v266 = vunpack.c.l.b16 %v185
      %v267 = vunpack.c.l.b16 %v186
      %v268 = vunpack.c.l.b16 %v187
      %v269 = vunpack.c.l.b16 %v188
      %v270 = vunpack.c.l.b16 %v189
      %v271 = vunpack.c.l.b16 %v190
      %v272 = vunpack.c.l.b16 %v191
      %v273 = vunpack.c.l.b16 %v192
      %v274 = vunpack.c.l.b16 %v193
      %v275 = vunpack.c.l.b16 %v194
      %v276 = vunpack.c.l.b16 %v195
      %v277 = vunpack.c.l.b16 %v196
      %v278 = vunpack.c.l.b16 %v197
      %v279 = vunpack.c.l.b16 %v198
      %v280 = vunpack.c.l.b16 %v199
      %v281 = vunpack.c.l.b16 %v200
      %v282 = vunpack.c.l.b16 %v201
      %v283 = vunpack.c.l.b16 %v202
      %v284 = vunpack.c.l.b16 %v203
      %v285 = vunpack.c.l.b16 %v204
      %v286 = vunpack.c.l.b16 %v205
      %v287 = vunpack.c.l.b16 %v206
      %v288 = vunpack.c.l.b16 %v207
      %v289 = vunpack.c.l.b16 %v208
      %v290 = vunpack.c.l.b16 %v209
      %v291 = vunpack.c.l.b16 %v210
      %v292 = vunpack.c.l.b16 %v211
      %v293 = vpack.c.b16 %v262, %v261
      %v294 = vpack.c.b16 %v264, %v263
      %v295 = vpack.c.b16 %v266, %v265
      %v296 = vpack.c.b16 %v268, %v267
      %v297 = vpack.c.b16 %v270, %v269
      %v298 = vpack.c.b16 %v272, %v271
      %v299 = vpack.c.b16 %v274, %v273
      %v300 = vpack.c.b16 %v276, %v275
      %v301 = vpack.c.b16 %v278, %v277
      %v302 = vpack.c.b16 %v280, %v279
      %v303 = vpack.c.b16 %v282, %v281
      %v304 = vpack.c.b16 %v284, %v283
      %v305 = vpack.c.b16 %v286, %v285
      %v306 = vpack.c.b16 %v288, %v287
      %v307 = vpack.c.b16 %v290, %v289
      %v308 = vpack.c.b16 %v292, %v291
      %325 = vmatprep.subr.bf16.mxu0 0
      %326 = vmatpush1.bf16.msra.mxu0 %v300
      %327 = vmatprep.subr.bf16.mxu0 0
      %328 = vmatpush1.bf16.msra.mxu0 %v299
      %329 = vmatprep.subr.bf16.mxu0 0
      %330 = vmatpush1.bf16.msra.mxu0 %v298
      %331 = vmatprep.subr.bf16.mxu0 0
      %332 = vmatpush1.bf16.msra.mxu0 %v297
      %333 = vmatprep.subr.bf16.mxu0 0
      %334 = vmatpush1.bf16.msra.mxu0 %v296
      %335 = vmatprep.subr.bf16.mxu0 0
      %336 = vmatpush1.bf16.msra.mxu0 %v295
      %337 = vmatprep.subr.bf16.mxu0 0
      %338 = vmatpush1.bf16.msra.mxu0 %v294
      %339 = vmatprep.subr.bf16.mxu0 0
      %340 = vmatpush1.bf16.msra.mxu0 %v293
      %341 = vmatprep.subr.bf16.mxu0 0
      %342 = vmatpush2.bf16.msra.mxu0 %v308
      %343 = vmatprep.subr.bf16.mxu0 0
      %344 = vmatpush2.bf16.msra.mxu0 %v307
      %345 = vmatprep.subr.bf16.mxu0 0
      %346 = vmatpush2.bf16.msra.mxu0 %v306
      %347 = vmatprep.subr.bf16.mxu0 0
      %348 = vmatpush2.bf16.msra.mxu0 %v305
      %349 = vmatprep.subr.bf16.mxu0 0
      %350 = vmatpush2.bf16.msra.mxu0 %v304
      %351 = vmatprep.subr.bf16.mxu0 0
      %352 = vmatpush2.bf16.msra.mxu0 %v303
      %353 = vmatprep.subr.bf16.mxu0 0
      %354 = vmatpush2.bf16.msra.mxu0 %v302
      %355 = vmatprep.subr.bf16.mxu0 0
      %356 = vmatpush2.bf16.msra.mxu0 %v301
      %357 = vmatprep.mubr.bf16.mxu0 %v226
      %358 = vmatmul.mubr.bf16.gmra.mxu0 %v225
      %v359 = vpop.f32.mrf.mxu0
      %v360 = vadd.f32 %v217, %v359
      %v361 = vpop.f32.mrf.mxu0
      %v362 = vpop.f32.mrf.mxu0
      %v363 = vadd.f32 %v217, %v362
      %v364 = vpop.f32.mrf.mxu0
      %365 = vdwg.mxu0
      %v366 = vmax.f32 %v360, 0.0
      %v367 = vmax.f32 %v363, 0.0
      %v368 = vpack.c.bf16 %v367, %v366
      %v370 = vunpack.c.l.b16 %v368
      %v371 = vunpack.c.h.b16 %v368
      %v372 = vpack.c.b16 %v370, %v370
      %v373 = vpack.c.b16 %v371, %v371
      %376 = vst [vmem:[%s175] sm:$0xf] %v372
      %377 = vst [vmem:[%s175 + $0x4] sm:$0xf] %v373
      %s378 = smul.u32 2, %s14
      %p379 = scmp.lt.s32.totalorder %s378, 3
      %s380 = scalar_select %p379, %s378, 3
      %s381 = smul.addr %s380, 4
      %s382 = scalar_lea.vmem %s3, %s381
      // Predicated region
      $region33: #{faster_rcnn_forward.5} parent=31 // pred_check
        %p383 = pneg %p100
      $region34: #{faster_rcnn_forward.5} parent=31 // pred_check_branch
        %385 = sbr.rel (%p383) target = $region36
      $region35: #{faster_rcnn_forward.5} parent=31 // pred_region
        %s386 = smul.u32 2, %s14
      $region36: #{faster_rcnn_forward.5} parent=31 // pred_fallthru
        _
    $region32: #{faster_rcnn_forward.5} parent=5 // pred_fallthru
      _
    %p387 = scmp.le.s32.totalorder 2, %s9
    // Predicated region
    $region37: #{faster_rcnn_forward.5} parent=5 // pred_check
      %p388 = pneg %p387
    $region38: #{faster_rcnn_forward.5} parent=5 // pred_check_branch
      %390 = sbr.rel (%p388) target = $region40
    $region39: #{faster_rcnn_forward.5} parent=5 // pred_region
      %s391 = ssub.s32 %s9, 2
      // Predicated region
      $region41: #{faster_rcnn_forward.5} parent=39 // pred_check
        %p392 = pneg %p106
      $region42: #{faster_rcnn_forward.5} parent=39 // pred_check_branch
        %394 = sbr.rel (%p392) target = $region44
      $region43: #{faster_rcnn_forward.5} parent=39 // pred_region
        %s395 = smul.u32 2, %s15
        %p396 = scmp.lt.s32.totalorder %s395, 3
        %s397 = scalar_select %p396, %s395, 3
        %s398 = smul.addr %s397, 4
        %s399 = scalar_lea.vmem %s3, %s398
      $region44: #{faster_rcnn_forward.5} parent=39 // pred_fallthru
        _
    $region40: #{faster_rcnn_forward.5} parent=5 // pred_fallthru
      _
  $region6: #{faster_rcnn_forward.5} parent=0 // loop_footer
    %s13 = sadd.s32 1, %s9
  $region7: #{faster_rcnn_forward.5} parent=0 // loop_footer_branch
    %8 = sbr.rel target = $region3
  $region8: #{faster_rcnn_forward.5} parent=0 // loop_exit
    _

// kernel: faster_rcnn_forward.7
$region0: #{faster_rcnn_forward.7}
  #allocation0 [shape = 'u32[]', space=smem, size = 0x4, offset = 0x4, fixed_abs, tag = 'smem constant byte address 0x4 - core index']
  #allocation1 [shape = 'u32[144,128]{1,0:T(1,128)}', space=vmem, size = 0x12000, scoped, tag = 'internal scratch']
  %s0 = inlined_call_operand.vmem [shape: bf16[16,128], index: 0, kind: input, shape index: {}]
  %s1 = inlined_call_operand.vmem [shape: bf16[128,128], index: 1, kind: input, shape index: {}]
  %s2 = inlined_call_operand.vmem [shape: f32[1,128], index: 2, kind: input, shape index: {}]
  %s3 = inlined_call_operand.vmem [shape: bf16[128,128], index: 3, kind: input, shape index: {}]
  %s4 = inlined_call_operand.vmem [shape: f32[1,128], index: 4, kind: input, shape index: {}]
  %s5 = inlined_call_operand.vmem [shape: bf16[128,128], index: 5, kind: input, shape index: {}]
  %s6 = inlined_call_operand.vmem [shape: f32[1,128], index: 6, kind: input, shape index: {}]
  %s7 = inlined_call_operand.vmem [shape: bf16[128,128], index: 7, kind: input, shape index: {}]
  %s8 = inlined_call_operand.vmem [shape: f32[1,128], index: 8, kind: input, shape index: {}]
  %s9 = inlined_call_operand.hbm [shape: bf16[16,128], index: 9, kind: output, shape index: {0}]
  %s10 = inlined_call_operand.vmem [shape: bf16[16,128], index: 10, kind: output, shape index: {1}]
  %s11 = inlined_call_operand.hbm [shape: f32[1,1], index: 11, kind: output, shape index: {2}]
  %12 = xla_tuple %s9, %s10, %s11
  %s13 = sld [smem:[#allocation0]]
  $region62: #{faster_rcnn_forward.7} parent=0
    _
  %s15 = ssub.s32 1, %s13
  %s16 = scalar_select 0, %s15, %s13
  $region1: #{faster_rcnn_forward.7} parent=0
    #allocation2 [shape = 'u8[4096]{0}', space=vmem, size = 0x1000, scoped, tag = 'output window, operand 0, single buffered']
    #allocation3 [shape = 's32[1]{0}', space=sflag, size = 0x4, scoped, tag = 'scoped memory for faster_rcnn_forward.7']
    #allocation4 [shape = 's32[1]{0}', space=sflag, size = 0x4, scoped, tag = 'scoped memory for faster_rcnn_forward.7']
    #allocation5 [shape = 'u8[512]{0}', space=smem, size = 0x200, scoped, tag = 'output window, operand 2, single buffered']
    %17 = vsyncpa [#allocation3], 0
    %18 = vsyncpa [#allocation4], 0
    // Predicated region
    $region2: #{faster_rcnn_forward.7} parent=1 // pred_check
      _
    $region3: #{faster_rcnn_forward.7} parent=1 // pred_check_branch
      %20 = sbr.rel (0) target = $region5
    $region4: #{faster_rcnn_forward.7} parent=1 // pred_region
      _
    $region5: #{faster_rcnn_forward.7} parent=1 // pred_fallthru
      _
    // Predicated region
    $region6: #{faster_rcnn_forward.7} parent=1 // pred_check
      _
    $region7: #{faster_rcnn_forward.7} parent=1 // pred_check_branch
      %22 = sbr.rel (0) target = $region9
    $region8: #{faster_rcnn_forward.7} parent=1 // pred_region
      _
    $region9: #{faster_rcnn_forward.7} parent=1 // pred_fallthru
      _
    // Predicated region
    $region10: #{faster_rcnn_forward.7} parent=1 // pred_check
      _
    $region11: #{faster_rcnn_forward.7} parent=1 // pred_check_branch
      %24 = sbr.rel (0) target = $region13
    $region12: #{faster_rcnn_forward.7} parent=1 // pred_region
      _
    $region13: #{faster_rcnn_forward.7} parent=1 // pred_fallthru
      _
    // Predicated region
    $region14: #{faster_rcnn_forward.7} parent=1 // pred_check
      _
    $region15: #{faster_rcnn_forward.7} parent=1 // pred_check_branch
      %26 = sbr.rel (0) target = $region17
    $region16: #{faster_rcnn_forward.7} parent=1 // pred_region
      _
    $region17: #{faster_rcnn_forward.7} parent=1 // pred_fallthru
      _
    // Predicated region
    $region18: #{faster_rcnn_forward.7} parent=1 // pred_check
      _
    $region19: #{faster_rcnn_forward.7} parent=1 // pred_check_branch
      %28 = sbr.rel (0) target = $region21
    $region20: #{faster_rcnn_forward.7} parent=1 // pred_region
      _
    $region21: #{faster_rcnn_forward.7} parent=1 // pred_fallthru
      _
    // Predicated region
    $region22: #{faster_rcnn_forward.7} parent=1 // pred_check
      _
    $region23: #{faster_rcnn_forward.7} parent=1 // pred_check_branch
      %30 = sbr.rel (0) target = $region25
    $region24: #{faster_rcnn_forward.7} parent=1 // pred_region
      _
    $region25: #{faster_rcnn_forward.7} parent=1 // pred_fallthru
      _
    // Predicated region
    $region26: #{faster_rcnn_forward.7} parent=1 // pred_check
      _
    $region27: #{faster_rcnn_forward.7} parent=1 // pred_check_branch
      %32 = sbr.rel (0) target = $region29
    $region28: #{faster_rcnn_forward.7} parent=1 // pred_region
      _
    $region29: #{faster_rcnn_forward.7} parent=1 // pred_fallthru
      _
    // Predicated region
    $region30: #{faster_rcnn_forward.7} parent=1 // pred_check
      _
    $region31: #{faster_rcnn_forward.7} parent=1 // pred_check_branch
      %34 = sbr.rel (0) target = $region33
    $region32: #{faster_rcnn_forward.7} parent=1 // pred_region
      _
    $region33: #{faster_rcnn_forward.7} parent=1 // pred_fallthru
      _
    // Predicated region
    $region34: #{faster_rcnn_forward.7} parent=1 // pred_check
      _
    $region35: #{faster_rcnn_forward.7} parent=1 // pred_check_branch
      %36 = sbr.rel (0) target = $region37
    $region36: #{faster_rcnn_forward.7} parent=1 // pred_region
      _
    $region37: #{faster_rcnn_forward.7} parent=1 // pred_fallthru
      _
    %v38 = vld [vmem:[%s0] sm:$0xf]
    %v39 = vld [vmem:[%s0 + $0x4] sm:$0xf]
    %v40 = vld [vmem:[%s1] sm:$0xf]
    %v41 = vld [vmem:[%s1 + $0x4] sm:$0xf]
    %v42 = vld [vmem:[%s1 + $0x8] sm:$0xf]
    %v43 = vld [vmem:[%s1 + $0xc] sm:$0xf]
    %v44 = vld [vmem:[%s1 + $0x10] sm:$0xf]
    %v45 = vld [vmem:[%s1 + $0x14] sm:$0xf]
    %v46 = vld [vmem:[%s1 + $0x18] sm:$0xf]
    %v47 = vld [vmem:[%s1 + $0x1c] sm:$0xf]
    %v48 = vld [vmem:[%s1 + $0x20] sm:$0xf]
    %v49 = vld [vmem:[%s1 + $0x24] sm:$0xf]
    %v50 = vld [vmem:[%s1 + $0x28] sm:$0xf]
    %v51 = vld [vmem:[%s1 + $0x2c] sm:$0xf]
    %v52 = vld [vmem:[%s1 + $0x30] sm:$0xf]
    %v53 = vld [vmem:[%s1 + $0x34] sm:$0xf]
    %v54 = vld [vmem:[%s1 + $0x38] sm:$0xf]
    %v55 = vld [vmem:[%s1 + $0x3c] sm:$0xf]
    %v56 = vld [vmem:[%s2] sm:$0x1]
    %v58 = vlaneseq
    %v59 = vshrl.u32 %v58, 7
    %v60 = vsub.s32 0, %v59
    %v61 = vrot.slane %v56, %v60
    %v65 = vunpack.c.l.b16 %v38
    %v66 = vunpack.c.l.b16 %v39
    %v67 = vpack.c.b16 %v66, %v65
    %v85 = vunpack.c.l.b16 %v40
    %v86 = vunpack.c.l.b16 %v41
    %v87 = vunpack.c.l.b16 %v42
    %v88 = vunpack.c.l.b16 %v43
    %v89 = vunpack.c.l.b16 %v44
    %v90 = vunpack.c.l.b16 %v45
    %v91 = vunpack.c.l.b16 %v46
    %v92 = vunpack.c.l.b16 %v47
    %v93 = vunpack.c.l.b16 %v48
    %v94 = vunpack.c.l.b16 %v49
    %v95 = vunpack.c.l.b16 %v50
    %v96 = vunpack.c.l.b16 %v51
    %v97 = vunpack.c.l.b16 %v52
    %v98 = vunpack.c.l.b16 %v53
    %v99 = vunpack.c.l.b16 %v54
    %v100 = vunpack.c.l.b16 %v55
    %v101 = vpack.c.b16 %v86, %v85
    %v102 = vpack.c.b16 %v88, %v87
    %v103 = vpack.c.b16 %v90, %v89
    %v104 = vpack.c.b16 %v92, %v91
    %v105 = vpack.c.b16 %v94, %v93
    %v106 = vpack.c.b16 %v96, %v95
    %v107 = vpack.c.b16 %v98, %v97
    %v108 = vpack.c.b16 %v100, %v99
    %117 = vmatprep.subr.bf16.mxu0 0
    %118 = vmatpush1.bf16.msra.mxu0 %v108
    %119 = vmatprep.subr.bf16.mxu0 0
    %120 = vmatpush1.bf16.msra.mxu0 %v107
    %121 = vmatprep.subr.bf16.mxu0 0
    %122 = vmatpush1.bf16.msra.mxu0 %v106
    %123 = vmatprep.subr.bf16.mxu0 0
    %124 = vmatpush1.bf16.msra.mxu0 %v105
    %125 = vmatprep.subr.bf16.mxu0 0
    %126 = vmatpush1.bf16.msra.mxu0 %v104
    %127 = vmatprep.subr.bf16.mxu0 0
    %128 = vmatpush1.bf16.msra.mxu0 %v103
    %129 = vmatprep.subr.bf16.mxu0 0
    %130 = vmatpush1.bf16.msra.mxu0 %v102
    %131 = vmatprep.subr.bf16.mxu0 0
    %132 = vmatpush1.bf16.msra.mxu0 %v101
    %133 = vmatprep.subr.bf16.mxu0 0
    %134 = vmatpush2.bf16.msra.mxu0 0
    %135 = vmatprep.subr.bf16.mxu0 0
    %136 = vmatpush2.bf16.msra.mxu0 0
    %137 = vmatprep.subr.bf16.mxu0 0
    %138 = vmatpush2.bf16.msra.mxu0 0
    %139 = vmatprep.subr.bf16.mxu0 0
    %140 = vmatpush2.bf16.msra.mxu0 0
    %141 = vmatprep.subr.bf16.mxu0 0
    %142 = vmatpush2.bf16.msra.mxu0 0
    %143 = vmatprep.subr.bf16.mxu0 0
    %144 = vmatpush2.bf16.msra.mxu0 0
    %145 = vmatprep.subr.bf16.mxu0 0
    %146 = vmatpush2.bf16.msra.mxu0 0
    %147 = vmatprep.subr.bf16.mxu0 0
    %148 = vmatpush2.bf16.msra.mxu0 0
    %149 = vmatprep.mubr.bf16.mxu0 0
    %150 = vmatmul.mubr.bf16.gmra.mxu0 %v67
    %v151 = vpop.f32.mrf.mxu0
    %v152 = vadd.f32 %v61, %v151
    %v153 = vpop.f32.mrf.mxu0
    %v154 = vpop.f32.mrf.mxu0
    %v155 = vadd.f32 %v61, %v154
    %v156 = vpop.f32.mrf.mxu0
    %157 = vdwg.mxu0
    %v158 = vmax.f32 %v152, 0.0
    %v159 = vmax.f32 %v155, 0.0
    %v160 = vpack.c.bf16 %v159, %v158
    %v161 = vld [vmem:[%s3] sm:$0xf]
    %v162 = vld [vmem:[%s3 + $0x4] sm:$0xf]
    %v163 = vld [vmem:[%s3 + $0x8] sm:$0xf]
    %v164 = vld [vmem:[%s3 + $0xc] sm:$0xf]
    %v165 = vld [vmem:[%s3 + $0x10] sm:$0xf]
    %v166 = vld [vmem:[%s3 + $0x14] sm:$0xf]
    %v167 = vld [vmem:[%s3 + $0x18] sm:$0xf]
    %v168 = vld [vmem:[%s3 + $0x1c] sm:$0xf]
    %v169 = vld [vmem:[%s3 + $0x20] sm:$0xf]
    %v170 = vld [vmem:[%s3 + $0x24] sm:$0xf]
    %v171 = vld [vmem:[%s3 + $0x28] sm:$0xf]
    %v172 = vld [vmem:[%s3 + $0x2c] sm:$0xf]
    %v173 = vld [vmem:[%s3 + $0x30] sm:$0xf]
    %v174 = vld [vmem:[%s3 + $0x34] sm:$0xf]
    %v175 = vld [vmem:[%s3 + $0x38] sm:$0xf]
    %v176 = vld [vmem:[%s3 + $0x3c] sm:$0xf]
    %v177 = vld [vmem:[%s4] sm:$0x1]
    %v179 = vlaneseq
    %v180 = vshrl.u32 %v179, 7
    %v181 = vsub.s32 0, %v180
    %v182 = vrot.slane %v177, %v181
    %v200 = vunpack.c.l.b16 %v161
    %v201 = vunpack.c.l.b16 %v162
    %v202 = vunpack.c.l.b16 %v163
    %v203 = vunpack.c.l.b16 %v164
    %v204 = vunpack.c.l.b16 %v165
    %v205 = vunpack.c.l.b16 %v166
    %v206 = vunpack.c.l.b16 %v167
    %v207 = vunpack.c.l.b16 %v168
    %v208 = vunpack.c.l.b16 %v169
    %v209 = vunpack.c.l.b16 %v170
    %v210 = vunpack.c.l.b16 %v171
    %v211 = vunpack.c.l.b16 %v172
    %v212 = vunpack.c.l.b16 %v173
    %v213 = vunpack.c.l.b16 %v174
    %v214 = vunpack.c.l.b16 %v175
    %v215 = vunpack.c.l.b16 %v176
    %v216 = vpack.c.b16 %v201, %v200
    %v217 = vpack.c.b16 %v203, %v202
    %v218 = vpack.c.b16 %v205, %v204
    %v219 = vpack.c.b16 %v207, %v206
    %v220 = vpack.c.b16 %v209, %v208
    %v221 = vpack.c.b16 %v211, %v210
    %v222 = vpack.c.b16 %v213, %v212
    %v223 = vpack.c.b16 %v215, %v214
    %232 = vmatprep.subr.bf16.mxu0 0
    %233 = vmatpush1.bf16.msra.mxu0 %v223
    %234 = vmatprep.subr.bf16.mxu0 0
    %235 = vmatpush1.bf16.msra.mxu0 %v222
    %236 = vmatprep.subr.bf16.mxu0 0
    %237 = vmatpush1.bf16.msra.mxu0 %v221
    %238 = vmatprep.subr.bf16.mxu0 0
    %239 = vmatpush1.bf16.msra.mxu0 %v220
    %240 = vmatprep.subr.bf16.mxu0 0
    %241 = vmatpush1.bf16.msra.mxu0 %v219
    %242 = vmatprep.subr.bf16.mxu0 0
    %243 = vmatpush1.bf16.msra.mxu0 %v218
    %244 = vmatprep.subr.bf16.mxu0 0
    %245 = vmatpush1.bf16.msra.mxu0 %v217
    %246 = vmatprep.subr.bf16.mxu0 0
    %247 = vmatpush1.bf16.msra.mxu0 %v216
    %248 = vmatprep.subr.bf16.mxu0 0
    %249 = vmatpush2.bf16.msra.mxu0 0
    %250 = vmatprep.subr.bf16.mxu0 0
    %251 = vmatpush2.bf16.msra.mxu0 0
    %252 = vmatprep.subr.bf16.mxu0 0
    %253 = vmatpush2.bf16.msra.mxu0 0
    %254 = vmatprep.subr.bf16.mxu0 0
    %255 = vmatpush2.bf16.msra.mxu0 0
    %256 = vmatprep.subr.bf16.mxu0 0
    %257 = vmatpush2.bf16.msra.mxu0 0
    %258 = vmatprep.subr.bf16.mxu0 0
    %259 = vmatpush2.bf16.msra.mxu0 0
    %260 = vmatprep.subr.bf16.mxu0 0
    %261 = vmatpush2.bf16.msra.mxu0 0
    %262 = vmatprep.subr.bf16.mxu0 0
    %263 = vmatpush2.bf16.msra.mxu0 0
    %264 = vmatprep.mubr.bf16.mxu0 0
    %265 = vmatmul.mubr.bf16.gmra.mxu0 %v160
    %v266 = vpop.f32.mrf.mxu0
    %v267 = vadd.f32 %v182, %v266
    %v268 = vpop.f32.mrf.mxu0
    %v269 = vpop.f32.mrf.mxu0
    %v270 = vadd.f32 %v182, %v269
    %v271 = vpop.f32.mrf.mxu0
    %272 = vdwg.mxu0
    %v273 = vmax.f32 %v267, 0.0
    %v274 = vmax.f32 %v270, 0.0
    %v275 = vpack.c.bf16 %v274, %v273
    %v277 = vunpack.c.l.b16 %v275
    %v278 = vunpack.c.h.b16 %v275
    %v279 = vpack.c.b16 %v277, %v277
    %v280 = vpack.c.b16 %v278, %v278
    %283 = vst [vmem:[#allocation2] sm:$0xf] %v279
    %284 = vst [vmem:[#allocation2 + $0x4] sm:$0xf] %v280
    %v285 = vld [vmem:[%s5] sm:$0xf]
    %v286 = vld [vmem:[%s5 + $0x4] sm:$0xf]
    %v287 = vld [vmem:[%s5 + $0x8] sm:$0xf]
    %v288 = vld [vmem:[%s5 + $0xc] sm:$0xf]
    %v289 = vld [vmem:[%s5 + $0x10] sm:$0xf]
    %v290 = vld [vmem:[%s5 + $0x14] sm:$0xf]
    %v291 = vld [vmem:[%s5 + $0x18] sm:$0xf]
    %v292 = vld [vmem:[%s5 + $0x1c] sm:$0xf]
    %v293 = vld [vmem:[%s5 + $0x20] sm:$0xf]
    %v294 = vld [vmem:[%s5 + $0x24] sm:$0xf]
    %v295 = vld [vmem:[%s5 + $0x28] sm:$0xf]
    %v296 = vld [vmem:[%s5 + $0x2c] sm:$0xf]
    %v297 = vld [vmem:[%s5 + $0x30] sm:$0xf]
    %v298 = vld [vmem:[%s5 + $0x34] sm:$0xf]
    %v299 = vld [vmem:[%s5 + $0x38] sm:$0xf]
    %v300 = vld [vmem:[%s5 + $0x3c] sm:$0xf]
    %v301 = vld [vmem:[%s6] sm:$0x1]
    %v303 = vlaneseq
    %v304 = vshrl.u32 %v303, 7
    %v305 = vsub.s32 0, %v304
    %v306 = vrot.slane %v301, %v305
    %v324 = vunpack.c.l.b16 %v285
    %v325 = vunpack.c.l.b16 %v286
    %v326 = vunpack.c.l.b16 %v287
    %v327 = vunpack.c.l.b16 %v288
    %v328 = vunpack.c.l.b16 %v289
    %v329 = vunpack.c.l.b16 %v290
    %v330 = vunpack.c.l.b16 %v291
    %v331 = vunpack.c.l.b16 %v292
    %v332 = vunpack.c.l.b16 %v293
    %v333 = vunpack.c.l.b16 %v294
    %v334 = vunpack.c.l.b16 %v295
    %v335 = vunpack.c.l.b16 %v296
    %v336 = vunpack.c.l.b16 %v297
    %v337 = vunpack.c.l.b16 %v298
    %v338 = vunpack.c.l.b16 %v299
    %v339 = vunpack.c.l.b16 %v300
    %v340 = vpack.c.b16 %v325, %v324
    %v341 = vpack.c.b16 %v327, %v326
    %v342 = vpack.c.b16 %v329, %v328
    %v343 = vpack.c.b16 %v331, %v330
    %v344 = vpack.c.b16 %v333, %v332
    %v345 = vpack.c.b16 %v335, %v334
    %v346 = vpack.c.b16 %v337, %v336
    %v347 = vpack.c.b16 %v339, %v338
    %356 = vmatprep.subr.bf16.mxu0 0
    %357 = vmatpush1.bf16.msra.mxu0 %v347
    %358 = vmatprep.subr.bf16.mxu0 0
    %359 = vmatpush1.bf16.msra.mxu0 %v346
    %360 = vmatprep.subr.bf16.mxu0 0
    %361 = vmatpush1.bf16.msra.mxu0 %v345
    %362 = vmatprep.subr.bf16.mxu0 0
    %363 = vmatpush1.bf16.msra.mxu0 %v344
    %364 = vmatprep.subr.bf16.mxu0 0
    %365 = vmatpush1.bf16.msra.mxu0 %v343
    %366 = vmatprep.subr.bf16.mxu0 0
    %367 = vmatpush1.bf16.msra.mxu0 %v342
    %368 = vmatprep.subr.bf16.mxu0 0
    %369 = vmatpush1.bf16.msra.mxu0 %v341
    %370 = vmatprep.subr.bf16.mxu0 0
    %371 = vmatpush1.bf16.msra.mxu0 %v340
    %372 = vmatprep.subr.bf16.mxu0 0
    %373 = vmatpush2.bf16.msra.mxu0 0
    %374 = vmatprep.subr.bf16.mxu0 0
    %375 = vmatpush2.bf16.msra.mxu0 0
    %376 = vmatprep.subr.bf16.mxu0 0
    %377 = vmatpush2.bf16.msra.mxu0 0
    %378 = vmatprep.subr.bf16.mxu0 0
    %379 = vmatpush2.bf16.msra.mxu0 0
    %380 = vmatprep.subr.bf16.mxu0 0
    %381 = vmatpush2.bf16.msra.mxu0 0
    %382 = vmatprep.subr.bf16.mxu0 0
    %383 = vmatpush2.bf16.msra.mxu0 0
    %384 = vmatprep.subr.bf16.mxu0 0
    %385 = vmatpush2.bf16.msra.mxu0 0
    %386 = vmatprep.subr.bf16.mxu0 0
    %387 = vmatpush2.bf16.msra.mxu0 0
    %388 = vmatprep.mubr.bf16.mxu0 0
    %389 = vmatmul.mubr.bf16.gmra.mxu0 %v275
    %v390 = vpop.f32.mrf.mxu0
    %v391 = vadd.f32 %v306, %v390
    %v392 = vpop.f32.mrf.mxu0
    %v393 = vpop.f32.mrf.mxu0
    %v394 = vadd.f32 %v306, %v393
    %v395 = vpop.f32.mrf.mxu0
    %396 = vdwg.mxu0
    %v397 = vlaneseq
    %v398 = vand.u32 %v397, 127
    %v399 = vlaneseq
    %v400 = vshrl.u32 %v399, 7
    %v401 = vadd.s32 %v400, 8
    %vm402 = vcmp.lt.s32.totalorder %v398, 4
    %v403 = vsel %vm402, %v391, -1e+30
    %v404 = vsel %vm402, %v394, -1e+30
    %405 = vmax.xlane.f32.xlu0 %v403
    %v406 = vpop.xlane.xlu0 %405
    %407 = vmax.xlane.f32.xlu0 %v404
    %v408 = vpop.xlane.xlu0 %407
    %v409 = vsub.f32 %v403, %v406
    %v410 = vsub.f32 %v404, %v408
    %v411 = vmul.f32 %v409, 1.442695
    %v412 = vpow.pop %v411
    %v413 = vmul.f32 %v410, 1.442695
    %v414 = vpow.pop %v413
    %v415 = vsel %vm402, %v412, 0.0
    %v416 = vsel %vm402, %v414, 0.0
    %417 = vadd.xlane.f32.xlu0 %v415
    %v418 = vpop.xlane.xlu0 %417
    %419 = vadd.xlane.f32.xlu0 %v416
    %v420 = vpop.xlane.xlu0 %419
    %v421 = vrcp.pop %v418
    %v422 = vrcp.pop %v420
    %v423 = vmul.f32 %v415, %v421
    %v424 = vmul.f32 %v416, %v422
    %v425 = vmax.f32 %v391, 0.0
    %v426 = vmax.f32 %v394, 0.0
    %v427 = vpack.c.bf16 %v426, %v425
    %v428 = vld [vmem:[%s7] sm:$0xf]
    %v429 = vld [vmem:[%s7 + $0x4] sm:$0xf]
    %v430 = vld [vmem:[%s7 + $0x8] sm:$0xf]
    %v431 = vld [vmem:[%s7 + $0xc] sm:$0xf]
    %v432 = vld [vmem:[%s7 + $0x10] sm:$0xf]
    %v433 = vld [vmem:[%s7 + $0x14] sm:$0xf]
    %v434 = vld [vmem:[%s7 + $0x18] sm:$0xf]
    %v435 = vld [vmem:[%s7 + $0x1c] sm:$0xf]
    %v436 = vld [vmem:[%s7 + $0x20] sm:$0xf]
    %v437 = vld [vmem:[%s7 + $0x24] sm:$0xf]
    %v438 = vld [vmem:[%s7 + $0x28] sm:$0xf]
    %v439 = vld [vmem:[%s7 + $0x2c] sm:$0xf]
    %v440 = vld [vmem:[%s7 + $0x30] sm:$0xf]
    %v441 = vld [vmem:[%s7 + $0x34] sm:$0xf]
    %v442 = vld [vmem:[%s7 + $0x38] sm:$0xf]
    %v443 = vld [vmem:[%s7 + $0x3c] sm:$0xf]
    %v444 = vld [vmem:[%s8] sm:$0x1]
    %v446 = vlaneseq
    %v447 = vshrl.u32 %v446, 7
    %v448 = vsub.s32 0, %v447
    %v449 = vrot.slane %v444, %v448
    %v467 = vunpack.c.l.b16 %v428
    %v468 = vunpack.c.l.b16 %v429
    %v469 = vunpack.c.l.b16 %v430
    %v470 = vunpack.c.l.b16 %v431
    %v471 = vunpack.c.l.b16 %v432
    %v472 = vunpack.c.l.b16 %v433
    %v473 = vunpack.c.l.b16 %v434
    %v474 = vunpack.c.l.b16 %v435
    %v475 = vunpack.c.l.b16 %v436
    %v476 = vunpack.c.l.b16 %v437
    %v477 = vunpack.c.l.b16 %v438
    %v478 = vunpack.c.l.b16 %v439
    %v479 = vunpack.c.l.b16 %v440
    %v480 = vunpack.c.l.b16 %v441
    %v481 = vunpack.c.l.b16 %v442
    %v482 = vunpack.c.l.b16 %v443
    %v483 = vpack.c.b16 %v468, %v467
    %v484 = vpack.c.b16 %v470, %v469
    %v485 = vpack.c.b16 %v472, %v471
    %v486 = vpack.c.b16 %v474, %v473
    %v487 = vpack.c.b16 %v476, %v475
    %v488 = vpack.c.b16 %v478, %v477
    %v489 = vpack.c.b16 %v480, %v479
    %v490 = vpack.c.b16 %v482, %v481
    %499 = vmatprep.subr.bf16.mxu0 0
    %500 = vmatpush1.bf16.msra.mxu0 %v490
    %501 = vmatprep.subr.bf16.mxu0 0
    %502 = vmatpush1.bf16.msra.mxu0 %v489
    %503 = vmatprep.subr.bf16.mxu0 0
    %504 = vmatpush1.bf16.msra.mxu0 %v488
    %505 = vmatprep.subr.bf16.mxu0 0
    %506 = vmatpush1.bf16.msra.mxu0 %v487
    %507 = vmatprep.subr.bf16.mxu0 0
    %508 = vmatpush1.bf16.msra.mxu0 %v486
    %509 = vmatprep.subr.bf16.mxu0 0
    %510 = vmatpush1.bf16.msra.mxu0 %v485
    %511 = vmatprep.subr.bf16.mxu0 0
    %512 = vmatpush1.bf16.msra.mxu0 %v484
    %513 = vmatprep.subr.bf16.mxu0 0
    %514 = vmatpush1.bf16.msra.mxu0 %v483
    %515 = vmatprep.subr.bf16.mxu0 0
    %516 = vmatpush2.bf16.msra.mxu0 0
    %517 = vmatprep.subr.bf16.mxu0 0
    %518 = vmatpush2.bf16.msra.mxu0 0
    %519 = vmatprep.subr.bf16.mxu0 0
    %520 = vmatpush2.bf16.msra.mxu0 0
    %521 = vmatprep.subr.bf16.mxu0 0
    %522 = vmatpush2.bf16.msra.mxu0 0
    %523 = vmatprep.subr.bf16.mxu0 0
    %524 = vmatpush2.bf16.msra.mxu0 0
    %525 = vmatprep.subr.bf16.mxu0 0
    %526 = vmatpush2.bf16.msra.mxu0 0
    %527 = vmatprep.subr.bf16.mxu0 0
    %528 = vmatpush2.bf16.msra.mxu0 0
    %529 = vmatprep.subr.bf16.mxu0 0
    %530 = vmatpush2.bf16.msra.mxu0 0
    %531 = vmatprep.mubr.bf16.mxu0 0
    %532 = vmatmul.mubr.bf16.gmra.mxu0 %v427
    %v533 = vpop.f32.mrf.mxu0
    %v534 = vadd.f32 %v449, %v533
    %v535 = vpop.f32.mrf.mxu0
    %v536 = vpop.f32.mrf.mxu0
    %v537 = vadd.f32 %v449, %v536
    %v538 = vpop.f32.mrf.mxu0
    %539 = vdwg.mxu0
    %v540 = vsub.f32 0.0, %v534
    %v541 = vsub.f32 0.0, %v537
    %v542 = vmul.f32 %v540, 1.442695
    %v543 = vpow.pop %v542
    %v544 = vmul.f32 %v541, 1.442695
    %v545 = vpow.pop %v544
    %v546 = vadd.f32 %v543, 1.0
    %v547 = vadd.f32 %v545, 1.0
    %v548 = vrcp.pop %v546
    %v549 = vrcp.pop %v547
    %v550 = vsel %vm402, %v423, %v391
    %v551 = vsel %vm402, %v424, %v394
    %vm552 = vcmp.eq.s32.totalorder %v398, 20
    %v553 = vsel %vm552, %v548, %v550
    %v554 = vsel %vm552, %v549, %v551
    %v555 = vpack.c.bf16 %v554, %v553
    %v557 = vunpack.c.l.b16 %v555
    %v558 = vunpack.c.h.b16 %v555
    %v559 = vpack.c.b16 %v557, %v557
    %v560 = vpack.c.b16 %v558, %v558
    %563 = vst [vmem:[%s10] sm:$0xf] %v559
    %564 = vst [vmem:[%s10 + $0x4] sm:$0xf] %v560
    %v565 = vmax.f32 %v548, 1e-07
    %v566 = vmax.f32 %v549, 1e-07
    %v567 = vmin.f32 %v565, 0.9999999
    %v568 = vmin.f32 %v566, 0.9999999
    %v569 = vlog2.pop %v567
    %v570 = vmul.f32 %v569, 0.6931472
    %v571 = vlog2.pop %v568
    %v572 = vmul.f32 %v571, 0.6931472
    %v573 = vmul.f32 %v570, 0.0
    %v574 = vmul.f32 %v572, 0.0
    %v575 = vsub.f32 1.0, %v567
    %v576 = vsub.f32 1.0, %v568
    %v577 = vlog2.pop %v575
    %v578 = vmul.f32 %v577, 0.6931472
    %v579 = vlog2.pop %v576
    %v580 = vmul.f32 %v579, 0.6931472
    %v581 = vadd.f32 %v573, %v578
    %v582 = vadd.f32 %v574, %v580
    %v583 = vsub.f32 0.0, %v581
    %v584 = vsub.f32 0.0, %v582
    %vm585 = vcmp.lt.s32.totalorder %v400, 16
    %vm586 = vcmp.lt.s32.totalorder %v401, 16
    %vm587 = vmand %vm552, %vm585
    %vm588 = vmand %vm552, %vm586
    %v589 = vsel %vm587, %v583, 0.0
    %v590 = vsel %vm588, %v584, 0.0
    %v591 = vadd.f32 %v589, %v590
    %592 = vadd.xlane.f32.xlu0 %v591
    %v593 = vpop.xlane.xlu0 %592
    %v594 = vrot.slane %v593, 4
    %v595 = vadd.f32 %v593, %v594
    %v596 = vrot.slane %v595, 2
    %v597 = vadd.f32 %v595, %v596
    %v598 = vrot.slane %v597, 1
    %v599 = vadd.f32 %v597, %v598
    %s600 = vtos %v599
    %v601 = vrcp.pop 16.0
    %s602 = vtos %v601
    %s603 = smul.f32 %s600, %s602
    %s604 = scalar_lea.smem [#allocation5], 0
    %605 = sst [smem:[%s604]] %s603
    // Predicated region
    $region38: #{faster_rcnn_forward.7} parent=1 // pred_check
      _
    $region39: #{faster_rcnn_forward.7} parent=1 // pred_check_branch
      %607 = sbr.rel (0) target = $region41
    $region40: #{faster_rcnn_forward.7} parent=1 // pred_region
      %s609 = ssub.s32 128, 128
      %610 = vsyncadd [#allocation3], %s609
      %s611 = sshll.u32 [#allocation2], 4
      %s612 = int_to_ptr.vmem [resolvable:$true] %s611
      %617 = dma.vmem_to_hbm [thread:$0]  %s612, 128, %s9, [#allocation3], 64, 64, 4
    $region41: #{faster_rcnn_forward.7} parent=1 // pred_fallthru
      _
    // Predicated region
    $region42: #{faster_rcnn_forward.7} parent=1 // pred_check
      _
    $region43: #{faster_rcnn_forward.7} parent=1 // pred_check_branch
      %619 = sbr.rel (0) target = $region45
    $region44: #{faster_rcnn_forward.7} parent=1 // pred_region
      _
    $region45: #{faster_rcnn_forward.7} parent=1 // pred_fallthru
      _
    // Predicated region
    $region46: #{faster_rcnn_forward.7} parent=1 // pred_check
      _
    $region47: #{faster_rcnn_forward.7} parent=1 // pred_check_branch
      %621 = sbr.rel (0) target = $region49
    $region48: #{faster_rcnn_forward.7} parent=1 // pred_region
      %s623 = ssub.s32 16, 16
      %624 = vsyncadd [#allocation4], %s623
      %627 = dma.smem_to_hbm [#allocation5], 16, %s11, [#allocation4]
    $region49: #{faster_rcnn_forward.7} parent=1 // pred_fallthru
      _
    // Predicated region
    $region50: #{faster_rcnn_forward.7} parent=1 // pred_check
      _
    $region51: #{faster_rcnn_forward.7} parent=1 // pred_check_branch
      %629 = sbr.rel (0) target = $region53
    $region52: #{faster_rcnn_forward.7} parent=1 // pred_region
      %630 = dma.done [#allocation3], 128
    $region53: #{faster_rcnn_forward.7} parent=1 // pred_fallthru
      _
    // Predicated region
    $region54: #{faster_rcnn_forward.7} parent=1 // pred_check
      _
    $region55: #{faster_rcnn_forward.7} parent=1 // pred_check_branch
      %632 = sbr.rel (0) target = $region57
    $region56: #{faster_rcnn_forward.7} parent=1 // pred_region
      _
    $region57: #{faster_rcnn_forward.7} parent=1 // pred_fallthru
      _
    // Predicated region
    $region58: #{faster_rcnn_forward.7} parent=1 // pred_check
      _
    $region59: #{faster_rcnn_forward.7} parent=1 // pred_check_branch
      %634 = sbr.rel (0) target = $region61
    $region60: #{faster_rcnn_forward.7} parent=1 // pred_region
      %635 = dma.done [#allocation4], 16
    $region61: #{faster_rcnn_forward.7} parent=1 // pred_fallthru
      _
    %636 = sfence
    %637 = vsyncpa [#allocation3], 1
    %638 = vsyncpa [#allocation4], 1

// kernel: faster_rcnn_forward.6
$region0: #{faster_rcnn_forward.6}
  #allocation0 [shape = 'u32[]', space=smem, size = 0x4, offset = 0x4, fixed_abs, tag = 'smem constant byte address 0x4 - core index']
  #allocation1 [shape = 'u32[144,128]{1,0:T(1,128)}', space=vmem, size = 0x12000, scoped, tag = 'internal scratch']
  %s0 = inlined_call_operand.vmem [shape: bf16[2,16,128], index: 0, kind: input, shape index: {}]
  %s1 = inlined_call_operand.vmem [shape: bf16[128,128], index: 1, kind: input, shape index: {}]
  %s2 = inlined_call_operand.vmem [shape: f32[1,128], index: 2, kind: input, shape index: {}]
  %s3 = inlined_call_operand.vmem [shape: bf16[128,128], index: 3, kind: input, shape index: {}]
  %s4 = inlined_call_operand.vmem [shape: f32[1,128], index: 4, kind: input, shape index: {}]
  %s5 = inlined_call_operand.vmem [shape: f32[16,128], index: 5, kind: output, shape index: {0}]
  %s6 = inlined_call_operand.vmem [shape: f32[16,128], index: 6, kind: output, shape index: {1}]
  %7 = xla_tuple %s5, %s6
  %s8 = sld [smem:[#allocation0]]
  $region61: #{faster_rcnn_forward.6} parent=0
    _
  %s10 = ssub.s32 1, %s8
  %s11 = scalar_select 0, %s10, %s8
  loop: start=0, step=1, limit=4
  $region2: #{faster_rcnn_forward.6} parent=0 // loop_pre_header
    _
  $region3: #{faster_rcnn_forward.6} parent=0 // loop_header
    %s13 = sphi 0, %s17
    %p14 = scmp.ge.s32.totalorder %s13, 4
    %s23 = sphi 0, %s25
    %s26 = sphi 0, %s23
    %s27 = sphi 0, %s26
    %s43 = sphi 0, %s27
    %s47 = sphi 0, %s47
    %s49 = sphi 0, %s47
    %s50 = sphi 0, %s49
    %s64 = sphi 0, %s50
    %s68 = sphi 0, %s68
    %s70 = sphi 0, %s68
    %s71 = sphi 0, %s70
    %s85 = sphi 0, %s71
    %s89 = sphi 0, %s89
    %s91 = sphi 0, %s89
    %s92 = sphi 0, %s91
    %s106 = sphi 0, %s92
    %s110 = sphi 0, %s110
    %s112 = sphi 0, %s110
    %s113 = sphi 0, %s112
    %s127 = sphi 0, %s113
    %s133 = sphi 0, %s135
    %s136 = sphi 0, %s133
    %s137 = sphi 0, %s136
    %s153 = sphi 0, %s137
    %s159 = sphi 0, %s161
    %s162 = sphi 0, %s159
    %s163 = sphi 0, %s162
    %s179 = sphi 0, %s163
  $region4: #{faster_rcnn_forward.6} parent=0 // loop_header_branch
    %16 = sbr.rel (%p14) target = $region8
  $region5: #{faster_rcnn_forward.6} parent=0 // loop_body
    %s18 = ssub.s32 %s13, 1
    %s19 = ssub.s32 %s13, 2
    %s20 = sadd.s32 %s13, 1
    %s21 = ssub.s32 %s13, %s20
    %p22 = scmp.eq.s32.totalorder %s21, 0
    %s24 = sadd.s32 %s23, 1
    %s25 = scalar_select %p22, %s23, %s24
    %p28 = pneg %p22
    %p29 = scmp.eq.s32.totalorder %s13, 1
    %p30 = por %p28, %p29
    %p31 = scmp.ne.s32.totalorder %s23, %s26
    %p32 = scmp.eq.s32.totalorder %s13, 0
    %p33 = por %p31, %p32
    %p34 = scmp.ne.s32.totalorder %s23, %s26
    %p35 = scmp.eq.s32.totalorder %s18, 1
    %p36 = por %p34, %p35
    %p37 = scmp.ne.s32.totalorder %s26, %s27
    %p38 = scmp.eq.s32.totalorder %s18, 0
    %p39 = por %p37, %p38
    %p40 = scmp.ne.s32.totalorder %s26, %s27
    %p41 = scmp.eq.s32.totalorder %s19, 1
    %p42 = por %p40, %p41
    %p44 = scmp.ne.s32.totalorder %s27, %s43
    %p45 = scmp.eq.s32.totalorder %s19, 0
    %p46 = por %p44, %p45
    %s48 = sadd.s32 %s47, 1
    %p51 = scmp.eq.s32.totalorder %s13, 1
    %p52 = scmp.ne.s32.totalorder %s47, %s49
    %p53 = scmp.eq.s32.totalorder %s13, 0
    %p54 = por %p52, %p53
    %p55 = scmp.ne.s32.totalorder %s47, %s49
    %p56 = scmp.eq.s32.totalorder %s18, 1
    %p57 = por %p55, %p56
    %p58 = scmp.ne.s32.totalorder %s49, %s50
    %p59 = scmp.eq.s32.totalorder %s18, 0
    %p60 = por %p58, %p59
    %p61 = scmp.ne.s32.totalorder %s49, %s50
    %p62 = scmp.eq.s32.totalorder %s19, 1
    %p63 = por %p61, %p62
    %p65 = scmp.ne.s32.totalorder %s50, %s64
    %p66 = scmp.eq.s32.totalorder %s19, 0
    %p67 = por %p65, %p66
    %s69 = sadd.s32 %s68, 1
    %p72 = scmp.eq.s32.totalorder %s13, 1
    %p73 = scmp.ne.s32.totalorder %s68, %s70
    %p74 = scmp.eq.s32.totalorder %s13, 0
    %p75 = por %p73, %p74
    %p76 = scmp.ne.s32.totalorder %s68, %s70
    %p77 = scmp.eq.s32.totalorder %s18, 1
    %p78 = por %p76, %p77
    %p79 = scmp.ne.s32.totalorder %s70, %s71
    %p80 = scmp.eq.s32.totalorder %s18, 0
    %p81 = por %p79, %p80
    %p82 = scmp.ne.s32.totalorder %s70, %s71
    %p83 = scmp.eq.s32.totalorder %s19, 1
    %p84 = por %p82, %p83
    %p86 = scmp.ne.s32.totalorder %s71, %s85
    %p87 = scmp.eq.s32.totalorder %s19, 0
    %p88 = por %p86, %p87
    %s90 = sadd.s32 %s89, 1
    %p93 = scmp.eq.s32.totalorder %s13, 1
    %p94 = scmp.ne.s32.totalorder %s89, %s91
    %p95 = scmp.eq.s32.totalorder %s13, 0
    %p96 = por %p94, %p95
    %p97 = scmp.ne.s32.totalorder %s89, %s91
    %p98 = scmp.eq.s32.totalorder %s18, 1
    %p99 = por %p97, %p98
    %p100 = scmp.ne.s32.totalorder %s91, %s92
    %p101 = scmp.eq.s32.totalorder %s18, 0
    %p102 = por %p100, %p101
    %p103 = scmp.ne.s32.totalorder %s91, %s92
    %p104 = scmp.eq.s32.totalorder %s19, 1
    %p105 = por %p103, %p104
    %p107 = scmp.ne.s32.totalorder %s92, %s106
    %p108 = scmp.eq.s32.totalorder %s19, 0
    %p109 = por %p107, %p108
    %s111 = sadd.s32 %s110, 1
    %p114 = scmp.eq.s32.totalorder %s13, 1
    %p115 = scmp.ne.s32.totalorder %s110, %s112
    %p116 = scmp.eq.s32.totalorder %s13, 0
    %p117 = por %p115, %p116
    %p118 = scmp.ne.s32.totalorder %s110, %s112
    %p119 = scmp.eq.s32.totalorder %s18, 1
    %p120 = por %p118, %p119
    %p121 = scmp.ne.s32.totalorder %s112, %s113
    %p122 = scmp.eq.s32.totalorder %s18, 0
    %p123 = por %p121, %p122
    %p124 = scmp.ne.s32.totalorder %s112, %s113
    %p125 = scmp.eq.s32.totalorder %s19, 1
    %p126 = por %p124, %p125
    %p128 = scmp.ne.s32.totalorder %s113, %s127
    %p129 = scmp.eq.s32.totalorder %s19, 0
    %p130 = por %p128, %p129
    %s131 = ssub.s32 %s13, %s20
    %p132 = scmp.eq.s32.totalorder %s131, 0
    %s134 = sadd.s32 %s133, 1
    %s135 = scalar_select %p132, %s133, %s134
    %p138 = pneg %p132
    %p139 = scmp.eq.s32.totalorder %s13, 1
    %p140 = por %p138, %p139
    %p141 = scmp.ne.s32.totalorder %s133, %s136
    %p142 = scmp.eq.s32.totalorder %s13, 0
    %p143 = por %p141, %p142
    %p144 = scmp.ne.s32.totalorder %s133, %s136
    %p145 = scmp.eq.s32.totalorder %s18, 1
    %p146 = por %p144, %p145
    %p147 = scmp.ne.s32.totalorder %s136, %s137
    %p148 = scmp.eq.s32.totalorder %s18, 0
    %p149 = por %p147, %p148
    %p150 = scmp.ne.s32.totalorder %s136, %s137
    %p151 = scmp.eq.s32.totalorder %s19, 1
    %p152 = por %p150, %p151
    %p154 = scmp.ne.s32.totalorder %s137, %s153
    %p155 = scmp.eq.s32.totalorder %s19, 0
    %p156 = por %p154, %p155
    %s157 = ssub.s32 %s13, %s20
    %p158 = scmp.eq.s32.totalorder %s157, 0
    %s160 = sadd.s32 %s159, 1
    %s161 = scalar_select %p158, %s159, %s160
    %p164 = pneg %p158
    %p165 = scmp.eq.s32.totalorder %s13, 1
    %p166 = por %p164, %p165
    %p167 = scmp.ne.s32.totalorder %s159, %s162
    %p168 = scmp.eq.s32.totalorder %s13, 0
    %p169 = por %p167, %p168
    %p170 = scmp.ne.s32.totalorder %s159, %s162
    %p171 = scmp.eq.s32.totalorder %s18, 1
    %p172 = por %p170, %p171
    %p173 = scmp.ne.s32.totalorder %s162, %s163
    %p174 = scmp.eq.s32.totalorder %s18, 0
    %p175 = por %p173, %p174
    %p176 = scmp.ne.s32.totalorder %s162, %s163
    %p177 = scmp.eq.s32.totalorder %s19, 1
    %p178 = por %p176, %p177
    %p180 = scmp.ne.s32.totalorder %s163, %s179
    %p181 = scmp.eq.s32.totalorder %s19, 0
    %p182 = por %p180, %p181
    %p183 = scmp.le.s32.totalorder 1, %s13
    %p184 = scmp.lt.s32.totalorder %s13, 3
    %p185 = pnand %p183, %p184
    %p186 = pneg %p185
    // Predicated region
    $region9: #{faster_rcnn_forward.6} parent=5 // pred_check
      _
    $region10: #{faster_rcnn_forward.6} parent=5 // pred_check_branch
      %188 = sbr.rel (%p185) target = $region12
    $region11: #{faster_rcnn_forward.6} parent=5 // pred_region
      %s189 = ssub.s32 %s13, 1
      // Predicated region
      $region13: #{faster_rcnn_forward.6} parent=11 // pred_check
        %p190 = pneg %p60
      $region14: #{faster_rcnn_forward.6} parent=11 // pred_check_branch
        %192 = sbr.rel (%p190) target = $region16
      $region15: #{faster_rcnn_forward.6} parent=11 // pred_region
        _
      $region16: #{faster_rcnn_forward.6} parent=11 // pred_fallthru
        _
      // Predicated region
      $region17: #{faster_rcnn_forward.6} parent=11 // pred_check
        %p193 = pneg %p81
      $region18: #{faster_rcnn_forward.6} parent=11 // pred_check_branch
        %195 = sbr.rel (%p193) target = $region20
      $region19: #{faster_rcnn_forward.6} parent=11 // pred_region
        _
      $region20: #{faster_rcnn_forward.6} parent=11 // pred_fallthru
        _
      // Predicated region
      $region21: #{faster_rcnn_forward.6} parent=11 // pred_check
        %p196 = pneg %p102
      $region22: #{faster_rcnn_forward.6} parent=11 // pred_check_branch
        %198 = sbr.rel (%p196) target = $region24
      $region23: #{faster_rcnn_forward.6} parent=11 // pred_region
        _
      $region24: #{faster_rcnn_forward.6} parent=11 // pred_fallthru
        _
      // Predicated region
      $region25: #{faster_rcnn_forward.6} parent=11 // pred_check
        %p199 = pneg %p123
      $region26: #{faster_rcnn_forward.6} parent=11 // pred_check_branch
        %201 = sbr.rel (%p199) target = $region28
      $region27: #{faster_rcnn_forward.6} parent=11 // pred_region
        _
      $region28: #{faster_rcnn_forward.6} parent=11 // pred_fallthru
        _
    $region12: #{faster_rcnn_forward.6} parent=5 // pred_fallthru
      _
    %p202 = scmp.lt.s32.totalorder %s13, 2
    // Predicated region
    $region29: #{faster_rcnn_forward.6} parent=5 // pred_check
      %p203 = pneg %p202
    $region30: #{faster_rcnn_forward.6} parent=5 // pred_check_branch
      %205 = sbr.rel (%p203) target = $region32
    $region31: #{faster_rcnn_forward.6} parent=5 // pred_region
      // Predicated region
      $region33: #{faster_rcnn_forward.6} parent=31 // pred_check
        %p206 = pneg %p33
      $region34: #{faster_rcnn_forward.6} parent=31 // pred_check_branch
        %208 = sbr.rel (%p206) target = $region36
      $region35: #{faster_rcnn_forward.6} parent=31 // pred_region
        %p209 = scmp.lt.s32.totalorder %s13, 1
        %s210 = scalar_select %p209, %s13, 1
        %s211 = smul.addr %s210, 2
        %s212 = smul.addr %s211, 4
        %s213 = scalar_lea.vmem %s0, %s212
      $region36: #{faster_rcnn_forward.6} parent=31 // pred_fallthru
        _
    $region32: #{faster_rcnn_forward.6} parent=5 // pred_fallthru
      _
    %p214 = scmp.le.s32.totalorder 1, %s13
    %p215 = scmp.lt.s32.totalorder %s13, 3
    %p216 = pnand %p214, %p215
    %p217 = pneg %p216
    // Predicated region
    $region37: #{faster_rcnn_forward.6} parent=5 // pred_check
      _
    $region38: #{faster_rcnn_forward.6} parent=5 // pred_check_branch
      %219 = sbr.rel (%p216) target = $region40
    $region39: #{faster_rcnn_forward.6} parent=5 // pred_region
      %s220 = ssub.s32 %s13, 1
      %p221 = scmp.lt.s32.totalorder %s18, 1
      %s222 = scalar_select %p221, %s18, 1
      %s223 = smul.addr %s222, 2
      %s224 = smul.addr %s223, 4
      %s225 = scalar_lea.vmem %s0, %s224
      %p226 = pneg %p39
      %p227 = pneg %p36
      %p228 = pneg %p60
      %p229 = pneg %p57
      %p230 = pneg %p81
      %p231 = pneg %p78
      %p232 = pneg %p102
      %p233 = pneg %p99
      %p234 = pneg %p123
      %p235 = pneg %p120
      %p236 = pneg %p149
      %p237 = pneg %p146
      %p238 = scmp.lt.s32.totalorder %s18, 1
      %s239 = scalar_select %p238, %s18, 1
      %s240 = smul.addr %s239, 8
      %s241 = scalar_lea.vmem %s5, %s240
      %p242 = pneg %p175
      %p243 = pneg %p172
      %p244 = scmp.lt.s32.totalorder %s18, 1
      %s245 = scalar_select %p244, %s18, 1
      %s246 = smul.addr %s245, 8
      %s247 = scalar_lea.vmem %s6, %s246
      %p248 = scmp.lt.s32.totalorder %s18, 1
      %s249 = scalar_select %p248, %s18, 1
      %s250 = smul.addr %s249, 2
      %s251 = smul.addr %s250, 4
      %s252 = scalar_lea.vmem %s0, %s251
      %p253 = scmp.lt.s32.totalorder %s18, 1
      %s254 = scalar_select %p253, %s18, 1
      %s255 = smul.addr %s254, 8
      %s256 = scalar_lea.vmem %s5, %s255
      %p257 = scmp.lt.s32.totalorder %s18, 1
      %s258 = scalar_select %p257, %s18, 1
      %s259 = smul.addr %s258, 8
      %s260 = scalar_lea.vmem %s6, %s259
      %v262 = vld [vmem:[%s252] sm:$0xf]
      %v263 = vld [vmem:[%s252 + $0x4] sm:$0xf]
      %v264 = vld [vmem:[%s1] sm:$0xf]
      %v265 = vld [vmem:[%s1 + $0x4] sm:$0xf]
      %v266 = vld [vmem:[%s1 + $0x8] sm:$0xf]
      %v267 = vld [vmem:[%s1 + $0xc] sm:$0xf]
      %v268 = vld [vmem:[%s1 + $0x10] sm:$0xf]
      %v269 = vld [vmem:[%s1 + $0x14] sm:$0xf]
      %v270 = vld [vmem:[%s1 + $0x18] sm:$0xf]
      %v271 = vld [vmem:[%s1 + $0x1c] sm:$0xf]
      %v272 = vld [vmem:[%s1 + $0x20] sm:$0xf]
      %v273 = vld [vmem:[%s1 + $0x24] sm:$0xf]
      %v274 = vld [vmem:[%s1 + $0x28] sm:$0xf]
      %v275 = vld [vmem:[%s1 + $0x2c] sm:$0xf]
      %v276 = vld [vmem:[%s1 + $0x30] sm:$0xf]
      %v277 = vld [vmem:[%s1 + $0x34] sm:$0xf]
      %v278 = vld [vmem:[%s1 + $0x38] sm:$0xf]
      %v279 = vld [vmem:[%s1 + $0x3c] sm:$0xf]
      %v280 = vld [vmem:[%s2] sm:$0x1]
      %v282 = vlaneseq
      %v283 = vshrl.u32 %v282, 7
      %v284 = vsub.s32 0, %v283
      %v285 = vrot.slane %v280, %v284
      %v289 = vunpack.c.l.b16 %v262
      %v290 = vunpack.c.l.b16 %v263
      %v291 = vpack.c.b16 %v290, %v289
      %v309 = vunpack.c.l.b16 %v264
      %v310 = vunpack.c.l.b16 %v265
      %v311 = vunpack.c.l.b16 %v266
      %v312 = vunpack.c.l.b16 %v267
      %v313 = vunpack.c.l.b16 %v268
      %v314 = vunpack.c.l.b16 %v269
      %v315 = vunpack.c.l.b16 %v270
      %v316 = vunpack.c.l.b16 %v271
      %v317 = vunpack.c.l.b16 %v272
      %v318 = vunpack.c.l.b16 %v273
      %v319 = vunpack.c.l.b16 %v274
      %v320 = vunpack.c.l.b16 %v275
      %v321 = vunpack.c.l.b16 %v276
      %v322 = vunpack.c.l.b16 %v277
      %v323 = vunpack.c.l.b16 %v278
      %v324 = vunpack.c.l.b16 %v279
      %v325 = vpack.c.b16 %v310, %v309
      %v326 = vpack.c.b16 %v312, %v311
      %v327 = vpack.c.b16 %v314, %v313
      %v328 = vpack.c.b16 %v316, %v315
      %v329 = vpack.c.b16 %v318, %v317
      %v330 = vpack.c.b16 %v320, %v319
      %v331 = vpack.c.b16 %v322, %v321
      %v332 = vpack.c.b16 %v324, %v323
      %341 = vmatprep.subr.bf16.mxu0 0
      %342 = vmatpush1.bf16.msra.mxu0 %v332
      %343 = vmatprep.subr.bf16.mxu0 0
      %344 = vmatpush1.bf16.msra.mxu0 %v331
      %345 = vmatprep.subr.bf16.mxu0 0
      %346 = vmatpush1.bf16.msra.mxu0 %v330
      %347 = vmatprep.subr.bf16.mxu0 0
      %348 = vmatpush1.bf16.msra.mxu0 %v329
      %349 = vmatprep.subr.bf16.mxu0 0
      %350 = vmatpush1.bf16.msra.mxu0 %v328
      %351 = vmatprep.subr.bf16.mxu0 0
      %352 = vmatpush1.bf16.msra.mxu0 %v327
      %353 = vmatprep.subr.bf16.mxu0 0
      %354 = vmatpush1.bf16.msra.mxu0 %v326
      %355 = vmatprep.subr.bf16.mxu0 0
      %356 = vmatpush1.bf16.msra.mxu0 %v325
      %357 = vmatprep.subr.bf16.mxu0 0
      %358 = vmatpush2.bf16.msra.mxu0 0
      %359 = vmatprep.subr.bf16.mxu0 0
      %360 = vmatpush2.bf16.msra.mxu0 0
      %361 = vmatprep.subr.bf16.mxu0 0
      %362 = vmatpush2.bf16.msra.mxu0 0
      %363 = vmatprep.subr.bf16.mxu0 0
      %364 = vmatpush2.bf16.msra.mxu0 0
      %365 = vmatprep.subr.bf16.mxu0 0
      %366 = vmatpush2.bf16.msra.mxu0 0
      %367 = vmatprep.subr.bf16.mxu0 0
      %368 = vmatpush2.bf16.msra.mxu0 0
      %369 = vmatprep.subr.bf16.mxu0 0
      %370 = vmatpush2.bf16.msra.mxu0 0
      %371 = vmatprep.subr.bf16.mxu0 0
      %372 = vmatpush2.bf16.msra.mxu0 0
      %373 = vmatprep.mubr.bf16.mxu0 0
      %374 = vmatmul.mubr.bf16.gmra.mxu0 %v291
      %v375 = vpop.f32.mrf.mxu0
      %v376 = vadd.f32 %v285, %v375
      %v377 = vpop.f32.mrf.mxu0
      %v378 = vpop.f32.mrf.mxu0
      %v379 = vadd.f32 %v285, %v378
      %v380 = vpop.f32.mrf.mxu0
      %381 = vdwg.mxu0
      %v382 = vmax.f32 %v376, 0.0
      %v383 = vmax.f32 %v379, 0.0
      %v384 = vlaneseq
      %v385 = vshrl.u32 %v384, 7
      %v386 = vadd.s32 %v385, 8
      %vm387 = vcmp.lt.s32.totalorder %v385, 16
      %vm388 = vcmp.lt.s32.totalorder %v386, 16
      %v389 = vsel %vm387, %v382, 0.0
      %v390 = vsel %vm388, %v383, 0.0
      %v391 = vadd.f32 %v389, %v390
      %v392 = vrot.slane %v391, 4
      %v393 = vadd.f32 %v391, %v392
      %v394 = vrot.slane %v393, 2
      %v395 = vadd.f32 %v393, %v394
      %v396 = vrot.slane %v395, 1
      %v397 = vadd.f32 %v395, %v396
      %v398 = vmul.f32 %v397, 0.0625
      %v399 = vpack.c.bf16 %v398, %v398
      %v400 = vld [vmem:[%s3] sm:$0xf]
      %v401 = vld [vmem:[%s3 + $0x4] sm:$0xf]
      %v402 = vld [vmem:[%s3 + $0x8] sm:$0xf]
      %v403 = vld [vmem:[%s3 + $0xc] sm:$0xf]
      %v404 = vld [vmem:[%s3 + $0x10] sm:$0xf]
      %v405 = vld [vmem:[%s3 + $0x14] sm:$0xf]
      %v406 = vld [vmem:[%s3 + $0x18] sm:$0xf]
      %v407 = vld [vmem:[%s3 + $0x1c] sm:$0xf]
      %v408 = vld [vmem:[%s3 + $0x20] sm:$0xf]
      %v409 = vld [vmem:[%s3 + $0x24] sm:$0xf]
      %v410 = vld [vmem:[%s3 + $0x28] sm:$0xf]
      %v411 = vld [vmem:[%s3 + $0x2c] sm:$0xf]
      %v412 = vld [vmem:[%s3 + $0x30] sm:$0xf]
      %v413 = vld [vmem:[%s3 + $0x34] sm:$0xf]
      %v414 = vld [vmem:[%s3 + $0x38] sm:$0xf]
      %v415 = vld [vmem:[%s3 + $0x3c] sm:$0xf]
      %v416 = vld [vmem:[%s4] sm:$0x1]
      %v418 = vlaneseq
      %v419 = vshrl.u32 %v418, 7
      %v420 = vsub.s32 0, %v419
      %v421 = vrot.slane %v416, %v420
      %v439 = vunpack.c.l.b16 %v400
      %v440 = vunpack.c.l.b16 %v401
      %v441 = vunpack.c.l.b16 %v402
      %v442 = vunpack.c.l.b16 %v403
      %v443 = vunpack.c.l.b16 %v404
      %v444 = vunpack.c.l.b16 %v405
      %v445 = vunpack.c.l.b16 %v406
      %v446 = vunpack.c.l.b16 %v407
      %v447 = vunpack.c.l.b16 %v408
      %v448 = vunpack.c.l.b16 %v409
      %v449 = vunpack.c.l.b16 %v410
      %v450 = vunpack.c.l.b16 %v411
      %v451 = vunpack.c.l.b16 %v412
      %v452 = vunpack.c.l.b16 %v413
      %v453 = vunpack.c.l.b16 %v414
      %v454 = vunpack.c.l.b16 %v415
      %v455 = vpack.c.b16 %v440, %v439
      %v456 = vpack.c.b16 %v442, %v441
      %v457 = vpack.c.b16 %v444, %v443
      %v458 = vpack.c.b16 %v446, %v445
      %v459 = vpack.c.b16 %v448, %v447
      %v460 = vpack.c.b16 %v450, %v449
      %v461 = vpack.c.b16 %v452, %v451
      %v462 = vpack.c.b16 %v454, %v453
      %471 = vmatprep.subr.bf16.mxu0 0
      %472 = vmatpush1.bf16.msra.mxu0 %v462
      %473 = vmatprep.subr.bf16.mxu0 0
      %474 = vmatpush1.bf16.msra.mxu0 %v461
      %475 = vmatprep.subr.bf16.mxu0 0
      %476 = vmatpush1.bf16.msra.mxu0 %v460
      %477 = vmatprep.subr.bf16.mxu0 0
      %478 = vmatpush1.bf16.msra.mxu0 %v459
      %479 = vmatprep.subr.bf16.mxu0 0
      %480 = vmatpush1.bf16.msra.mxu0 %v458
      %481 = vmatprep.subr.bf16.mxu0 0
      %482 = vmatpush1.bf16.msra.mxu0 %v457
      %483 = vmatprep.subr.bf16.mxu0 0
      %484 = vmatpush1.bf16.msra.mxu0 %v456
      %485 = vmatprep.subr.bf16.mxu0 0
      %486 = vmatpush1.bf16.msra.mxu0 %v455
      %487 = vmatprep.subr.bf16.mxu0 0
      %488 = vmatpush2.bf16.msra.mxu0 0
      %489 = vmatprep.subr.bf16.mxu0 0
      %490 = vmatpush2.bf16.msra.mxu0 0
      %491 = vmatprep.subr.bf16.mxu0 0
      %492 = vmatpush2.bf16.msra.mxu0 0
      %493 = vmatprep.subr.bf16.mxu0 0
      %494 = vmatpush2.bf16.msra.mxu0 0
      %495 = vmatprep.subr.bf16.mxu0 0
      %496 = vmatpush2.bf16.msra.mxu0 0
      %497 = vmatprep.subr.bf16.mxu0 0
      %498 = vmatpush2.bf16.msra.mxu0 0
      %499 = vmatprep.subr.bf16.mxu0 0
      %500 = vmatpush2.bf16.msra.mxu0 0
      %501 = vmatprep.subr.bf16.mxu0 0
      %502 = vmatpush2.bf16.msra.mxu0 0
      %503 = vmatprep.mubr.bf16.mxu0 0
      %504 = vmatmul.mubr.bf16.gmra.mxu0 %v399
      %v505 = vpop.f32.mrf.mxu0
      %v506 = vadd.f32 %v421, %v505
      %v507 = vpop.f32.mrf.mxu0
      %v508 = vpop.f32.mrf.mxu0
      %v509 = vpop.f32.mrf.mxu0
      %510 = vdwg.mxu0
      %511 = vst [vmem:[%s256] sm:$0xff] %v398
      %512 = vst [vmem:[%s260] sm:$0xff] %v506
      %p513 = scmp.lt.s32.totalorder %s18, 1
      %s514 = scalar_select %p513, %s18, 1
      %s515 = smul.addr %s514, 8
      %s516 = scalar_lea.vmem %s5, %s515
      %p517 = scmp.lt.s32.totalorder %s18, 1
      %s518 = scalar_select %p517, %s18, 1
      %s519 = smul.addr %s518, 8
      %s520 = scalar_lea.vmem %s6, %s519
      // Predicated region
      $region41: #{faster_rcnn_forward.6} parent=39 // pred_check
        %p521 = pneg %p146
      $region42: #{faster_rcnn_forward.6} parent=39 // pred_check_branch
        %523 = sbr.rel (%p521) target = $region44
      $region43: #{faster_rcnn_forward.6} parent=39 // pred_region
        _
      $region44: #{faster_rcnn_forward.6} parent=39 // pred_fallthru
        _
      // Predicated region
      $region45: #{faster_rcnn_forward.6} parent=39 // pred_check
        %p524 = pneg %p172
      $region46: #{faster_rcnn_forward.6} parent=39 // pred_check_branch
        %526 = sbr.rel (%p524) target = $region48
      $region47: #{faster_rcnn_forward.6} parent=39 // pred_region
        _
      $region48: #{faster_rcnn_forward.6} parent=39 // pred_fallthru
        _
    $region40: #{faster_rcnn_forward.6} parent=5 // pred_fallthru
      _
    %p527 = scmp.le.s32.totalorder 2, %s13
    // Predicated region
    $region49: #{faster_rcnn_forward.6} parent=5 // pred_check
      %p528 = pneg %p527
    $region50: #{faster_rcnn_forward.6} parent=5 // pred_check_branch
      %530 = sbr.rel (%p528) target = $region52
    $region51: #{faster_rcnn_forward.6} parent=5 // pred_region
      %s531 = ssub.s32 %s13, 2
      // Predicated region
      $region53: #{faster_rcnn_forward.6} parent=51 // pred_check
        %p532 = pneg %p152
      $region54: #{faster_rcnn_forward.6} parent=51 // pred_check_branch
        %534 = sbr.rel (%p532) target = $region56
      $region55: #{faster_rcnn_forward.6} parent=51 // pred_region
        %p535 = scmp.lt.s32.totalorder %s19, 1
        %s536 = scalar_select %p535, %s19, 1
        %s537 = smul.addr %s536, 8
        %s538 = scalar_lea.vmem %s5, %s537
      $region56: #{faster_rcnn_forward.6} parent=51 // pred_fallthru
        _
      // Predicated region
      $region57: #{faster_rcnn_forward.6} parent=51 // pred_check
        %p539 = pneg %p178
      $region58: #{faster_rcnn_forward.6} parent=51 // pred_check_branch
        %541 = sbr.rel (%p539) target = $region60
      $region59: #{faster_rcnn_forward.6} parent=51 // pred_region
        %p542 = scmp.lt.s32.totalorder %s19, 1
        %s543 = scalar_select %p542, %s19, 1
        %s544 = smul.addr %s543, 8
        %s545 = scalar_lea.vmem %s6, %s544
      $region60: #{faster_rcnn_forward.6} parent=51 // pred_fallthru
        _
    $region52: #{faster_rcnn_forward.6} parent=5 // pred_fallthru
      _
  $region6: #{faster_rcnn_forward.6} parent=0 // loop_footer
    %s17 = sadd.s32 1, %s13
  $region7: #{faster_rcnn_forward.6} parent=0 // loop_footer_branch
    %12 = sbr.rel target = $region3
  $region8: #{faster_rcnn_forward.6} parent=0 // loop_exit
    _

</llo_original>
